<compile_context>
chip_gen: v7x
topology: tpu7x:2x2x1
jax: 0.10.0
libtpu: 0.0.40
codegen_flags: <defaults>
</compile_context>

<pallas_src>
import functools

import jax
import jax.numpy as jnp
from jax.experimental import pallas as pl
from jax.experimental.pallas import tpu as pltpu


def _attn_cls_kernel(x_ref, wv_ref, bv_ref, wu_ref, bu_ref,
                     wwt_ref, bw_ref, wc_ref, bc_ref,
                     out_ref,
                     m_scr, l_scr, acc_scr,
                     *, n_total, tile_n):
    i = pl.program_id(0)
    n_tiles = pl.num_programs(0)

    @pl.when(i == 0)
    def _init():
        m_scr[...] = jnp.full(m_scr.shape, -jnp.inf, jnp.float32)
        l_scr[...] = jnp.zeros(l_scr.shape, jnp.float32)
        acc_scr[...] = jnp.zeros(acc_scr.shape, jnp.float32)

    x = x_ref[...]                                                  # (TN, L)

    # Gated attention branch (MXU matmuls, f32 accumulation; tanh/sigmoid in f32).
    a_v = jnp.tanh(
        jnp.dot(x, wv_ref[...], preferred_element_type=jnp.float32) + bv_ref[...])
    a_u = jax.nn.sigmoid(
        jnp.dot(x, wu_ref[...], preferred_element_type=jnp.float32) + bu_ref[...])
    gated = a_v * a_u                                               # (TN, D) f32

    # Attention logits directly in lane-dense (K, TN) layout: contract over D.
    logits = jax.lax.dot_general(
        wwt_ref[...], gated, (((1,), (1,)), ((), ())),
        preferred_element_type=jnp.float32) + bw_ref[...]           # (K, TN)

    # Mask padded rows (beyond the true bag size) on the last (partial) tile.
    col = jax.lax.broadcasted_iota(jnp.int32, logits.shape, 1)
    valid = (i * tile_n + col) < n_total
    logits = jnp.where(valid, logits, jnp.float32(-1e30))

    # Online softmax over the instance (lane) axis.
    m_prev = m_scr[...]                                             # (K, 1)
    m_new = jnp.maximum(m_prev, jnp.max(logits, axis=-1, keepdims=True))
    alpha = jnp.exp(m_prev - m_new)                                 # (K, 1)
    p = jnp.exp(logits - m_new)                                     # (K, TN)
    l_scr[...] = alpha * l_scr[...] + jnp.sum(p, axis=-1, keepdims=True)
    acc_scr[...] = alpha * acc_scr[...] + jnp.dot(
        p.astype(x.dtype), x, preferred_element_type=jnp.float32)   # (K, L)
    m_scr[...] = m_new

    @pl.when(i == n_tiles - 1)
    def _finalize():
        inv_l = pl.reciprocal(l_scr[...], approx=True)              # (K, 1)
        afeat = acc_scr[...] * inv_l                                # (K, L)
        pred = jnp.dot(afeat, wc_ref[...],
                       preferred_element_type=jnp.float32) + bc_ref[...]
        out_ref[...] = pred.astype(out_ref.dtype)


def attention_with_classifier(x, params, *, tile_n=None, mxu_dtype=None):
    """x: (N, L) bag. params: (Wv, bv, Wu, bu, Ww, bw, Wc, bc) stored as (in,out)/(1,out)."""
    wv, bv, wu, bu, ww, bw, wc, bc = params
    N, L = x.shape
    D = wv.shape[1]
    K = ww.shape[1]
    C = wc.shape[1]

    if mxu_dtype is None:
        mxu_dtype = x.dtype
    itemsize = jnp.dtype(mxu_dtype).itemsize

    # Attention-weight layer stored lane-dense: (K, D) weights, (K, 1) bias.
    wwt = ww.T.astype(jnp.float32)
    bwt = bw.reshape(K, 1).astype(jnp.float32)

    # Big operands (x, gating weights) in MXU dtype; everything else f32.
    wv_c = wv.astype(mxu_dtype)
    wu_c = wu.astype(mxu_dtype)
    bv_c = bv.astype(jnp.float32)
    bu_c = bu.astype(jnp.float32)
    wc_c = wc.astype(jnp.float32)
    bc_c = bc.astype(jnp.float32)

    weight_bytes = ((wv_c.size + wu_c.size) * itemsize
                    + (wwt.size + bwt.size + bv_c.size + bu_c.size
                       + wc_c.size + bc_c.size) * 4)

    # Auto tile size: multiple of 128, double-buffered x tile within a
    # conservative budget (safe under the default scoped VMEM on all gens).
    if tile_n is None:
        budget = 24 * 1024 * 1024
        per_row = 2 * L * itemsize                      # double-buffered x row
        tile_n = max(128, min(2048, (budget // max(per_row, 1)) // 128 * 128))
    tile_n = int(tile_n)

    n_pad = ((N + tile_n - 1) // tile_n) * tile_n
    if n_pad != N:
        x = jnp.pad(x, ((0, n_pad - N), (0, 0)))
    x = x.astype(mxu_dtype)
    n_tiles = n_pad // tile_n

    vmem_limit = int(min(56 * 1024 * 1024,
                         max(16 * 1024 * 1024,
                             4 * tile_n * L * itemsize + 2 * weight_bytes
                             + 4 * (K * (L + 2)) + 2 * 1024 * 1024)))

    cost = pl.CostEstimate(
        flops=int(2 * n_pad * L * D * 2        # two gating matmuls
                  + 2 * n_pad * D * K          # logits
                  + 2 * K * n_pad * L          # attention pooling
                  + 2 * K * L * C),            # classifier
        transcendentals=int(2 * n_pad * D + n_pad * K),
        bytes_accessed=int(n_pad * L * itemsize + weight_bytes + K * C * 4),
    )

    def _const(i):               # weights DMA'd once, VMEM-resident across tiles
        return (0, 0)

    kernel = functools.partial(_attn_cls_kernel, n_total=N, tile_n=tile_n)

    grid_spec = pltpu.PrefetchScalarGridSpec(
        num_scalar_prefetch=0,
        grid=(n_tiles,),
        in_specs=[
            pl.BlockSpec((tile_n, L), lambda i: (i, 0)),   # x: streamed over N
            pl.BlockSpec((L, D), _const),                  # Wv
            pl.BlockSpec((1, D), _const),                  # bv
            pl.BlockSpec((L, D), _const),                  # Wu
            pl.BlockSpec((1, D), _const),                  # bu
            pl.BlockSpec((K, D), _const),                  # Ww^T
            pl.BlockSpec((K, 1), _const),                  # bw^T
            pl.BlockSpec((L, C), _const),                  # Wc
            pl.BlockSpec((1, C), _const),                  # bc
        ],
        out_specs=pl.BlockSpec((K, C), _const),
        scratch_shapes=[
            pltpu.VMEM((K, 1), jnp.float32),   # running max
            pltpu.VMEM((K, 1), jnp.float32),   # running denom
            pltpu.VMEM((K, L), jnp.float32),   # afeat accumulator
        ],
    )

    return pl.pallas_call(
        kernel,
        out_shape=jax.ShapeDtypeStruct((K, C), jnp.float32),
        grid_spec=grid_spec,
        compiler_params=pltpu.CompilerParams(
            dimension_semantics=("arbitrary",),   # softmax reduction over N
            vmem_limit_bytes=vmem_limit,
        ),
        cost_estimate=cost,
    )(x, wv_c, bv_c, wu_c, bu_c, wwt, bwt, wc_c, bc_c)


def _init_linear(key, fan_in, fan_out):
    # PyTorch-style uniform(-1/sqrt(fan_in), 1/sqrt(fan_in)); stored as (in, out).
    kw, kb = jax.random.split(key)
    bound = 1.0 / jnp.sqrt(jnp.float32(fan_in))
    w = jax.random.uniform(kw, (fan_in, fan_out), jnp.float32, -bound, bound)
    b = jax.random.uniform(kb, (1, fan_out), jnp.float32, -bound, bound)
    return w, b


def _reference(x, params):
    wv, bv, wu, bu, ww, bw, wc, bc = params
    a_v = jnp.tanh(x @ wv + bv)
    a_u = jax.nn.sigmoid(x @ wu + bu)
    a = (a_v * a_u) @ ww + bw                 # (N, K)
    a = jax.nn.softmax(a.T, axis=1)           # (K, N)
    afeat = a @ x                             # (K, L)
    return afeat @ wc + bc                    # (K, C)


if __name__ == "__main__":
    # Module defaults (L=512, D=128, K=1, num_cls=2) with a bag of 300 instances
    # (not a multiple of the tile so the masked partial tile is exercised).
    N, L, D, K, NUM_CLS = 300, 512, 128, 1, 2

    key = jax.random.PRNGKey(0)
    kx, kv, ku, kw, kc = jax.random.split(key, 5)

    x = jax.random.normal(kx, (N, L), jnp.float32)
    wv, bv = _init_linear(kv, L, D)        # attention_V
    wu, bu = _init_linear(ku, L, D)        # attention_U
    ww, bw = _init_linear(kw, D, K)        # attention_weights
    wc, bc = _init_linear(kc, L, NUM_CLS)  # classifier fc
    params = (wv, bv, wu, bu, ww, bw, wc, bc)

    # f32 path, 3 grid steps (tile_n=128) incl. one masked partial tile.
    pred = attention_with_classifier(x, params, tile_n=128)
    pred = jax.block_until_ready(pred)
    ref = _reference(x, params)
    assert pred.shape == (K, NUM_CLS)
    assert jnp.allclose(pred, ref, atol=5e-3, rtol=5e-3), (pred, ref)

    # bf16 MXU path (v6e/v7x recommendation): check it runs and stays close.
    pred_bf16 = attention_with_classifier(x, params, tile_n=256,
                                          mxu_dtype=jnp.bfloat16)
    pred_bf16 = jax.block_until_ready(pred_bf16)
    assert pred_bf16.shape == (K, NUM_CLS)
    assert bool(jnp.all(jnp.isfinite(pred_bf16)))

    print("KERNEL_OK")
</pallas_src>

<mosaic_0001>
module attributes {stable_mosaic.version = 11 : i64} {
  func.func @_attn_cls_kernel(%arg0: i32, %arg1: memref<128x512xf32, #tpu.memory_space<vmem>>, %arg2: memref<512x128xf32, #tpu.memory_space<vmem>>, %arg3: memref<1x128xf32, #tpu.memory_space<vmem>>, %arg4: memref<512x128xf32, #tpu.memory_space<vmem>>, %arg5: memref<1x128xf32, #tpu.memory_space<vmem>>, %arg6: memref<1x128xf32, #tpu.memory_space<vmem>>, %arg7: memref<1x1xf32, #tpu.memory_space<vmem>>, %arg8: memref<512x2xf32, #tpu.memory_space<vmem>>, %arg9: memref<1x2xf32, #tpu.memory_space<vmem>>, %arg10: memref<1x2xf32, #tpu.memory_space<vmem>>, %arg11: memref<1x1xf32, #tpu.memory_space<vmem>>, %arg12: memref<1x1xf32, #tpu.memory_space<vmem>>, %arg13: memref<1x512xf32, #tpu.memory_space<vmem>>) attributes {dimension_semantics = [#tpu.dimension_semantics<arbitrary>], iteration_bounds = array<i64: 3>, scalar_prefetch = 0 : i64, scratch_operands = 3 : i64, tpu.core_type = #tpu.core_type<tc>, window_params = [{transform_indices = @transform_0, window_bounds = array<i64: 128, 512>}, {pipeline_mode = #tpu.pipeline_mode<synchronous>, transform_indices = @transform_1, window_bounds = array<i64: 512, 128>}, {pipeline_mode = #tpu.pipeline_mode<synchronous>, transform_indices = @transform_2, window_bounds = array<i64: 1, 128>}, {pipeline_mode = #tpu.pipeline_mode<synchronous>, transform_indices = @transform_3, window_bounds = array<i64: 512, 128>}, {pipeline_mode = #tpu.pipeline_mode<synchronous>, transform_indices = @transform_4, window_bounds = array<i64: 1, 128>}, {pipeline_mode = #tpu.pipeline_mode<synchronous>, transform_indices = @transform_5, window_bounds = array<i64: 1, 128>}, {pipeline_mode = #tpu.pipeline_mode<synchronous>, transform_indices = @transform_6, window_bounds = array<i64: 1, 1>}, {pipeline_mode = #tpu.pipeline_mode<synchronous>, transform_indices = @transform_7, window_bounds = array<i64: 512, 2>}, {pipeline_mode = #tpu.pipeline_mode<synchronous>, transform_indices = @transform_8, window_bounds = array<i64: 1, 2>}, {pipeline_mode = #tpu.pipeline_mode<synchronous>, transform_indices = @transform_9, window_bounds = array<i64: 1, 2>}]} {
    %c0_i32 = arith.constant 0 : i32
    %0 = arith.cmpi eq, %arg0, %c0_i32 : i32
    %1 = arith.extui %0 : i1 to i32
    %c0_i32_0 = arith.constant 0 : i32
    %2 = arith.cmpi ne, %1, %c0_i32_0 : i32
    scf.if %2 {
      %cst_34 = arith.constant 0xFF800000 : f32
      %59 = vector.broadcast %cst_34 : f32 to vector<1x1xf32>
      %c0_35 = arith.constant 0 : index
      %c0_36 = arith.constant 0 : index
      %60 = vector.load %arg11[%c0_35, %c0_36] : memref<1x1xf32, #tpu.memory_space<vmem>>, vector<1x1xf32>
      tpu.vector_store %arg11[%c0_35, %c0_36], %59 {strides = array<i32>} : memref<1x1xf32, #tpu.memory_space<vmem>>, vector<1x1xf32>,
      %cst_37 = arith.constant 0.000000e+00 : f32
      %61 = vector.broadcast %cst_37 : f32 to vector<1x1xf32>
      %c0_38 = arith.constant 0 : index
      %c0_39 = arith.constant 0 : index
      %62 = vector.load %arg12[%c0_38, %c0_39] : memref<1x1xf32, #tpu.memory_space<vmem>>, vector<1x1xf32>
      tpu.vector_store %arg12[%c0_38, %c0_39], %61 {strides = array<i32>} : memref<1x1xf32, #tpu.memory_space<vmem>>, vector<1x1xf32>,
      %cst_40 = arith.constant 0.000000e+00 : f32
      %63 = vector.broadcast %cst_40 : f32 to vector<1x512xf32>
      %c0_41 = arith.constant 0 : index
      %c0_42 = arith.constant 0 : index
      %64 = vector.load %arg13[%c0_41, %c0_42] : memref<1x512xf32, #tpu.memory_space<vmem>>, vector<1x512xf32>
      tpu.vector_store %arg13[%c0_41, %c0_42], %63 {strides = array<i32>} : memref<1x512xf32, #tpu.memory_space<vmem>>, vector<1x512xf32>,
    } else {
    }
    %c0 = arith.constant 0 : index
    %c0_1 = arith.constant 0 : index
    %3 = vector.load %arg1[%c0, %c0_1] : memref<128x512xf32, #tpu.memory_space<vmem>>, vector<128x512xf32>
    %c0_2 = arith.constant 0 : index
    %c0_3 = arith.constant 0 : index
    %4 = vector.load %arg2[%c0_2, %c0_3] : memref<512x128xf32, #tpu.memory_space<vmem>>, vector<512x128xf32>
    %cst = arith.constant dense<0.000000e+00> : vector<128x128xf32>
    %5 = tpu.matmul %3, %4, %cst {dimension_numbers = #tpu.dot_dimension_numbers<[1], [0], [0], [1], [0, 0, 1, 1], [], []>} : vector<128x512xf32>, vector<512x128xf32>, vector<128x128xf32> -> vector<128x128xf32>
    %c0_4 = arith.constant 0 : index
    %c0_5 = arith.constant 0 : index
    %6 = vector.load %arg3[%c0_4, %c0_5] : memref<1x128xf32, #tpu.memory_space<vmem>>, vector<1x128xf32>
    %7 = vector.broadcast %6 : vector<1x128xf32> to vector<128x128xf32>
    %8 = arith.addf %5, %7 : vector<128x128xf32>
    %9 = math.tanh %8 : vector<128x128xf32>
    %c0_6 = arith.constant 0 : index
    %c0_7 = arith.constant 0 : index
    %10 = vector.load %arg4[%c0_6, %c0_7] : memref<512x128xf32, #tpu.memory_space<vmem>>, vector<512x128xf32>
    %cst_8 = arith.constant dense<0.000000e+00> : vector<128x128xf32>
    %11 = tpu.matmul %3, %10, %cst_8 {dimension_numbers = #tpu.dot_dimension_numbers<[1], [0], [0], [1], [0, 0, 1, 1], [], []>} : vector<128x512xf32>, vector<512x128xf32>, vector<128x128xf32> -> vector<128x128xf32>
    %c0_9 = arith.constant 0 : index
    %c0_10 = arith.constant 0 : index
    %12 = vector.load %arg5[%c0_9, %c0_10] : memref<1x128xf32, #tpu.memory_space<vmem>>, vector<1x128xf32>
    %13 = vector.broadcast %12 : vector<1x128xf32> to vector<128x128xf32>
    %14 = arith.addf %11, %13 : vector<128x128xf32>
    %15 = arith.negf %14 : vector<128x128xf32>
    %16 = math.exp %15 : vector<128x128xf32>
    %cst_11 = arith.constant 1.000000e+00 : f32
    %17 = vector.broadcast %cst_11 : f32 to vector<128x128xf32>
    %18 = arith.addf %17, %16 : vector<128x128xf32>
    %19 = arith.divf %17, %18 : vector<128x128xf32>
    %20 = arith.mulf %9, %19 : vector<128x128xf32>
    %c0_12 = arith.constant 0 : index
    %c0_13 = arith.constant 0 : index
    %21 = vector.load %arg6[%c0_12, %c0_13] : memref<1x128xf32, #tpu.memory_space<vmem>>, vector<1x128xf32>
    %cst_14 = arith.constant dense<0.000000e+00> : vector<1x128xf32>
    %22 = tpu.matmul %21, %20, %cst_14 {dimension_numbers = #tpu.dot_dimension_numbers<[1], [1], [0], [0], [0, 0, 1, 0], [], []>} : vector<1x128xf32>, vector<128x128xf32>, vector<1x128xf32> -> vector<1x128xf32>
    %c0_15 = arith.constant 0 : index
    %c0_16 = arith.constant 0 : index
    %23 = vector.load %arg7[%c0_15, %c0_16] : memref<1x1xf32, #tpu.memory_space<vmem>>, vector<1x1xf32>
    %24 = vector.broadcast %23 : vector<1x1xf32> to vector<1x128xf32>
    %25 = arith.addf %22, %24 : vector<1x128xf32>
    %26 = tpu.iota {dimensions = array<i32: 1>} : vector<1x128xi32>
    %c128_i32 = arith.constant 128 : i32
    %27 = arith.muli %arg0, %c128_i32 : i32
    %28 = vector.broadcast %27 : i32 to vector<1x128xi32>
    %29 = arith.addi %28, %26 : vector<1x128xi32>
    %c300_i32 = arith.constant 300 : i32
    %30 = vector.broadcast %c300_i32 : i32 to vector<1x128xi32>
    %31 = arith.cmpi slt, %29, %30 : vector<1x128xi32>
    %cst_17 = arith.constant -1.000000e+30 : f32
    %32 = vector.broadcast %cst_17 : f32 to vector<1x128xf32>
    %33 = arith.select %31, %25, %32 : vector<1x128xi1>, vector<1x128xf32>
    %c0_18 = arith.constant 0 : index
    %c0_19 = arith.constant 0 : index
    %34 = vector.load %arg11[%c0_18, %c0_19] : memref<1x1xf32, #tpu.memory_space<vmem>>, vector<1x1xf32>
    %cst_20 = arith.constant dense<0xFF800000> : vector<1xf32>
    %35 = vector.multi_reduction <maximumf>, %33, %cst_20 [1] : vector<1x128xf32> to vector<1xf32>
    %36 = vector.shape_cast %35 : vector<1xf32> to vector<1x1xf32>
    %37 = arith.maximumf %34, %36 : vector<1x1xf32>
    %38 = arith.subf %34, %37 : vector<1x1xf32>
    %39 = math.exp %38 : vector<1x1xf32>
    %40 = vector.broadcast %37 : vector<1x1xf32> to vector<1x128xf32>
    %41 = arith.subf %33, %40 : vector<1x128xf32>
    %42 = math.exp %41 : vector<1x128xf32>
    %c0_21 = arith.constant 0 : index
    %c0_22 = arith.constant 0 : index
    %43 = vector.load %arg12[%c0_21, %c0_22] : memref<1x1xf32, #tpu.memory_space<vmem>>, vector<1x1xf32>
    %44 = arith.mulf %39, %43 : vector<1x1xf32>
    %cst_23 = arith.constant dense<0.000000e+00> : vector<1xf32>
    %45 = vector.multi_reduction <add>, %42, %cst_23 [1] : vector<1x128xf32> to vector<1xf32>
    %46 = vector.shape_cast %45 : vector<1xf32> to vector<1x1xf32>
    %47 = arith.addf %44, %46 : vector<1x1xf32>
    %c0_24 = arith.constant 0 : index
    %c0_25 = arith.constant 0 : index
    %48 = vector.load %arg12[%c0_24, %c0_25] : memref<1x1xf32, #tpu.memory_space<vmem>>, vector<1x1xf32>
    tpu.vector_store %arg12[%c0_24, %c0_25], %47 {strides = array<i32>} : memref<1x1xf32, #tpu.memory_space<vmem>>, vector<1x1xf32>,
    %c0_26 = arith.constant 0 : index
    %c0_27 = arith.constant 0 : index
    %49 = vector.load %arg13[%c0_26, %c0_27] : memref<1x512xf32, #tpu.memory_space<vmem>>, vector<1x512xf32>
    %50 = vector.broadcast %39 : vector<1x1xf32> to vector<1x512xf32>
    %51 = arith.mulf %50, %49 : vector<1x512xf32>
    %cst_28 = arith.constant dense<0.000000e+00> : vector<1x512xf32>
    %52 = tpu.matmul %42, %3, %cst_28 {dimension_numbers = #tpu.dot_dimension_numbers<[1], [0], [0], [1], [0, 0, 1, 1], [], []>} : vector<1x128xf32>, vector<128x512xf32>, vector<1x512xf32> -> vector<1x512xf32>
    %53 = arith.addf %51, %52 : vector<1x512xf32>
    %c0_29 = arith.constant 0 : index
    %c0_30 = arith.constant 0 : index
    %54 = vector.load %arg13[%c0_29, %c0_30] : memref<1x512xf32, #tpu.memory_space<vmem>>, vector<1x512xf32>
    tpu.vector_store %arg13[%c0_29, %c0_30], %53 {strides = array<i32>} : memref<1x512xf32, #tpu.memory_space<vmem>>, vector<1x512xf32>,
    %c0_31 = arith.constant 0 : index
    %c0_32 = arith.constant 0 : index
    %55 = vector.load %arg11[%c0_31, %c0_32] : memref<1x1xf32, #tpu.memory_space<vmem>>, vector<1x1xf32>
    tpu.vector_store %arg11[%c0_31, %c0_32], %37 {strides = array<i32>} : memref<1x1xf32, #tpu.memory_space<vmem>>, vector<1x1xf32>,
    %c2_i32 = arith.constant 2 : i32
    %56 = arith.cmpi eq, %arg0, %c2_i32 : i32
    %57 = arith.extui %56 : i1 to i32
    %c0_i32_33 = arith.constant 0 : i32
    %58 = arith.cmpi ne, %57, %c0_i32_33 : i32
    scf.if %58 {
      %c0_34 = arith.constant 0 : index
      %c0_35 = arith.constant 0 : index
      %59 = vector.load %arg12[%c0_34, %c0_35] : memref<1x1xf32, #tpu.memory_space<vmem>>, vector<1x1xf32>
      %60 = tpu.reciprocal %59 {approx = true} : vector<1x1xf32> -> vector<1x1xf32>
      %c0_36 = arith.constant 0 : index
      %c0_37 = arith.constant 0 : index
      %61 = vector.load %arg13[%c0_36, %c0_37] : memref<1x512xf32, #tpu.memory_space<vmem>>, vector<1x512xf32>
      %62 = vector.broadcast %60 : vector<1x1xf32> to vector<1x512xf32>
      %63 = arith.mulf %61, %62 : vector<1x512xf32>
      %c0_38 = arith.constant 0 : index
      %c0_39 = arith.constant 0 : index
      %64 = vector.load %arg8[%c0_38, %c0_39] : memref<512x2xf32, #tpu.memory_space<vmem>>, vector<512x2xf32>
      %cst_40 = arith.constant dense<0.000000e+00> : vector<1x2xf32>
      %65 = tpu.matmul %63, %64, %cst_40 {dimension_numbers = #tpu.dot_dimension_numbers<[1], [0], [0], [1], [0, 0, 1, 1], [], []>} : vector<1x512xf32>, vector<512x2xf32>, vector<1x2xf32> -> vector<1x2xf32>
      %c0_41 = arith.constant 0 : index
      %c0_42 = arith.constant 0 : index
      %66 = vector.load %arg9[%c0_41, %c0_42] : memref<1x2xf32, #tpu.memory_space<vmem>>, vector<1x2xf32>
      %67 = arith.addf %65, %66 : vector<1x2xf32>
      %c0_43 = arith.constant 0 : index
      %c0_44 = arith.constant 0 : index
      %68 = vector.load %arg10[%c0_43, %c0_44] : memref<1x2xf32, #tpu.memory_space<vmem>>, vector<1x2xf32>
      tpu.vector_store %arg10[%c0_43, %c0_44], %67 {strides = array<i32>} : memref<1x2xf32, #tpu.memory_space<vmem>>, vector<1x2xf32>,
    } else {
    }
    return
  }
  func.func @transform_0(%arg0: i32) -> (i32, i32) {
    %c0_i32 = arith.constant 0 : i32
    %c0_i32_0 = arith.constant 0 : i32
    return %arg0, %c0_i32 : i32, i32
  }
  func.func @transform_1(%arg0: i32) -> (i32, i32) {
    %c0_i32 = arith.constant 0 : i32
    %c0_i32_0 = arith.constant 0 : i32
    %c0_i32_1 = arith.constant 0 : i32
    return %c0_i32, %c0_i32_0 : i32, i32
  }
  func.func @transform_2(%arg0: i32) -> (i32, i32) {
    %c0_i32 = arith.constant 0 : i32
    %c0_i32_0 = arith.constant 0 : i32
    %c0_i32_1 = arith.constant 0 : i32
    return %c0_i32, %c0_i32_0 : i32, i32
  }
  func.func @transform_3(%arg0: i32) -> (i32, i32) {
    %c0_i32 = arith.constant 0 : i32
    %c0_i32_0 = arith.constant 0 : i32
    %c0_i32_1 = arith.constant 0 : i32
    return %c0_i32, %c0_i32_0 : i32, i32
  }
  func.func @transform_4(%arg0: i32) -> (i32, i32) {
    %c0_i32 = arith.constant 0 : i32
    %c0_i32_0 = arith.constant 0 : i32
    %c0_i32_1 = arith.constant 0 : i32
    return %c0_i32, %c0_i32_0 : i32, i32
  }
  func.func @transform_5(%arg0: i32) -> (i32, i32) {
    %c0_i32 = arith.constant 0 : i32
    %c0_i32_0 = arith.constant 0 : i32
    %c0_i32_1 = arith.constant 0 : i32
    return %c0_i32, %c0_i32_0 : i32, i32
  }
  func.func @transform_6(%arg0: i32) -> (i32, i32) {
    %c0_i32 = arith.constant 0 : i32
    %c0_i32_0 = arith.constant 0 : i32
    %c0_i32_1 = arith.constant 0 : i32
    return %c0_i32, %c0_i32_0 : i32, i32
  }
  func.func @transform_7(%arg0: i32) -> (i32, i32) {
    %c0_i32 = arith.constant 0 : i32
    %c0_i32_0 = arith.constant 0 : i32
    %c0_i32_1 = arith.constant 0 : i32
    return %c0_i32, %c0_i32_0 : i32, i32
  }
  func.func @transform_8(%arg0: i32) -> (i32, i32) {
    %c0_i32 = arith.constant 0 : i32
    %c0_i32_0 = arith.constant 0 : i32
    %c0_i32_1 = arith.constant 0 : i32
    return %c0_i32, %c0_i32_0 : i32, i32
  }
  func.func @transform_9(%arg0: i32) -> (i32, i32) {
    %c0_i32 = arith.constant 0 : i32
    %c0_i32_0 = arith.constant 0 : i32
    %c0_i32_1 = arith.constant 0 : i32
    return %c0_i32, %c0_i32_0 : i32, i32
  }
}

</mosaic_0001>

<llo_original>
// kernel: tpu_custom_call.1
$region0: #{tpu_custom_call.1}
  #allocation0 [shape = 'u32[]', space=smem, size = 0x4, offset = 0x4, fixed_abs, tag = 'smem constant byte address 0x4 - core index']
  #allocation1 [shape = 'u32[144,128]{1,0:T(1,128)}', space=vmem, size = 0x12000, scoped, tag = 'internal scratch']
  #allocation2 [shape = 'f32[1,1]{1,0:T(1,128)}', space=vmem, size = 0x200, scoped, tag = 'scratch operand']
  #allocation3 [shape = 'f32[1,1]{1,0:T(1,128)}', space=vmem, size = 0x200, scoped, tag = 'scratch operand']
  #allocation4 [shape = 'f32[1,512]{1,0:T(1,128)}', space=vmem, size = 0x800, scoped, tag = 'scratch operand']
  #allocation5 [shape = 'f32[1,1]{1,0:T(1,128)S(1)}', space=vmem, size = 0x200, scoped, tag = 'scoped memory for tpu_custom_call.1']
  %s0 = inlined_call_operand.hbm [shape: f32[384,512], index: 0, kind: input, shape index: {}]
  %s1 = inlined_call_operand.vmem [shape: f32[512,128], index: 1, kind: input, shape index: {}]
  %s2 = inlined_call_operand.vmem [shape: f32[1,128], index: 2, kind: input, shape index: {}]
  %s3 = inlined_call_operand.hbm [shape: f32[512,128], index: 3, kind: input, shape index: {}]
  %s4 = inlined_call_operand.vmem [shape: f32[1,128], index: 4, kind: input, shape index: {}]
  %s5 = inlined_call_operand.vmem [shape: f32[1,128], index: 5, kind: input, shape index: {}]
  %s6 = inlined_call_operand.<no memory space> [shape: f32[1,1], index: 6, kind: input, shape index: {}]
  %s7 = inlined_call_operand.vmem [shape: f32[512,2], index: 7, kind: input, shape index: {}]
  %s8 = inlined_call_operand.vmem [shape: f32[1,2], index: 8, kind: input, shape index: {}]
  %s9 = inlined_call_operand.hbm [shape: f32[1,2], index: 9, kind: output, shape index: {}]
  %s10 = sld [smem:[#allocation0]]
  $region85: #{tpu_custom_call.1} parent=0
    _
  %s12 = ssub.s32 1, %s10
  %s13 = scalar_select 0, %s12, %s10
  %v14 = vstv %s6
  %15 = vst [vmem:[#allocation5] sm:$0x1] %v14
  $region1: #{tpu_custom_call.1} parent=0
    #allocation6 [shape = 'u8[524288]{0}', space=vmem, size = 0x80000, scoped, tag = 'input window, operand 0']
    #allocation7 [shape = 's32[2]{0}', space=sflag, size = 0x8, scoped, tag = 'scoped memory for tpu_custom_call.1']
    #allocation8 [shape = 's32[2]{0}', space=sflag, size = 0x8, scoped, tag = 'scoped memory for tpu_custom_call.1']
    #allocation9 [shape = 'u8[262144]{0}', space=vmem, size = 0x40000, scoped, tag = 'input window, operand 3, single buffered']
    #allocation10 [shape = 's32[1]{0}', space=sflag, size = 0x4, scoped, tag = 'scoped memory for tpu_custom_call.1']
    #allocation11 [shape = 'u8[512]{0}', space=vmem, size = 0x400, scoped, tag = 'output window, operand 0, single buffered']
    %16 = vsyncpa [#allocation7], 0
    %s17 = scalar_lea.sflag [#allocation7], 1
    %18 = vsyncpa %s17, 0
    %19 = vsyncpa [#allocation10], 0
    %20 = vsyncpa [#allocation8], 0
    loop: start=0, step=1, limit=5
    $region2: #{tpu_custom_call.1} parent=1 // loop_pre_header
      _
    $region3: #{tpu_custom_call.1} parent=1 // loop_header
      %s22 = sphi 0, %s26
      %p23 = scmp.ge.s32.totalorder %s22, 5
      %s32 = sphi 0, %s34
      %s35 = sphi 0, %s32
      %s36 = sphi 0, %s35
      %s52 = sphi 0, %s36
      %s56 = sphi 0, %s56
      %s58 = sphi 0, %s56
      %s59 = sphi 0, %s58
      %s73 = sphi 0, %s59
      %s77 = sphi 0, %s77
      %s79 = sphi 0, %s77
      %s80 = sphi 0, %s79
      %s94 = sphi 0, %s80
      %s98 = sphi 0, %s98
      %s100 = sphi 0, %s98
      %s101 = sphi 0, %s100
      %s115 = sphi 0, %s101
      %s119 = sphi 0, %s119
      %s121 = sphi 0, %s119
      %s122 = sphi 0, %s121
      %s136 = sphi 0, %s122
      %s140 = sphi 0, %s140
      %s142 = sphi 0, %s140
      %s143 = sphi 0, %s142
      %s157 = sphi 0, %s143
      %s161 = sphi 0, %s161
      %s163 = sphi 0, %s161
      %s164 = sphi 0, %s163
      %s178 = sphi 0, %s164
      %s182 = sphi 0, %s182
      %s184 = sphi 0, %s182
      %s185 = sphi 0, %s184
      %s199 = sphi 0, %s185
      %s203 = sphi 0, %s203
      %s205 = sphi 0, %s203
      %s206 = sphi 0, %s205
      %s220 = sphi 0, %s206
      %s224 = sphi 0, %s224
      %s226 = sphi 0, %s224
      %s227 = sphi 0, %s226
      %s241 = sphi 0, %s227
    $region4: #{tpu_custom_call.1} parent=1 // loop_header_branch
      %25 = sbr.rel (%p23) target = $region8
    $region5: #{tpu_custom_call.1} parent=1 // loop_body
      %s27 = ssub.s32 %s22, 1
      %s28 = ssub.s32 %s22, 2
      %s29 = sadd.s32 %s22, 1
      %s30 = ssub.s32 %s22, %s29
      %p31 = scmp.eq.s32.totalorder %s30, 0
      %s33 = sadd.s32 %s32, 1
      %s34 = scalar_select %p31, %s32, %s33
      %p37 = pneg %p31
      %p38 = scmp.eq.s32.totalorder %s22, 2
      %p39 = por %p37, %p38
      %p40 = scmp.ne.s32.totalorder %s32, %s35
      %p41 = scmp.eq.s32.totalorder %s22, 0
      %p42 = por %p40, %p41
      %p43 = scmp.ne.s32.totalorder %s32, %s35
      %p44 = scmp.eq.s32.totalorder %s27, 2
      %p45 = por %p43, %p44
      %p46 = scmp.ne.s32.totalorder %s35, %s36
      %p47 = scmp.eq.s32.totalorder %s27, 0
      %p48 = por %p46, %p47
      %p49 = scmp.ne.s32.totalorder %s35, %s36
      %p50 = scmp.eq.s32.totalorder %s28, 2
      %p51 = por %p49, %p50
      %p53 = scmp.ne.s32.totalorder %s36, %s52
      %p54 = scmp.eq.s32.totalorder %s28, 0
      %p55 = por %p53, %p54
      %s57 = sadd.s32 %s56, 1
      %p60 = scmp.eq.s32.totalorder %s22, 2
      %p61 = scmp.ne.s32.totalorder %s56, %s58
      %p62 = scmp.eq.s32.totalorder %s22, 0
      %p63 = por %p61, %p62
      %p64 = scmp.ne.s32.totalorder %s56, %s58
      %p65 = scmp.eq.s32.totalorder %s27, 2
      %p66 = por %p64, %p65
      %p67 = scmp.ne.s32.totalorder %s58, %s59
      %p68 = scmp.eq.s32.totalorder %s27, 0
      %p69 = por %p67, %p68
      %p70 = scmp.ne.s32.totalorder %s58, %s59
      %p71 = scmp.eq.s32.totalorder %s28, 2
      %p72 = por %p70, %p71
      %p74 = scmp.ne.s32.totalorder %s59, %s73
      %p75 = scmp.eq.s32.totalorder %s28, 0
      %p76 = por %p74, %p75
      %s78 = sadd.s32 %s77, 1
      %p81 = scmp.eq.s32.totalorder %s22, 2
      %p82 = scmp.ne.s32.totalorder %s77, %s79
      %p83 = scmp.eq.s32.totalorder %s22, 0
      %p84 = por %p82, %p83
      %p85 = scmp.ne.s32.totalorder %s77, %s79
      %p86 = scmp.eq.s32.totalorder %s27, 2
      %p87 = por %p85, %p86
      %p88 = scmp.ne.s32.totalorder %s79, %s80
      %p89 = scmp.eq.s32.totalorder %s27, 0
      %p90 = por %p88, %p89
      %p91 = scmp.ne.s32.totalorder %s79, %s80
      %p92 = scmp.eq.s32.totalorder %s28, 2
      %p93 = por %p91, %p92
      %p95 = scmp.ne.s32.totalorder %s80, %s94
      %p96 = scmp.eq.s32.totalorder %s28, 0
      %p97 = por %p95, %p96
      %s99 = sadd.s32 %s98, 1
      %p102 = scmp.eq.s32.totalorder %s22, 2
      %p103 = scmp.ne.s32.totalorder %s98, %s100
      %p104 = scmp.eq.s32.totalorder %s22, 0
      %p105 = por %p103, %p104
      %p106 = scmp.ne.s32.totalorder %s98, %s100
      %p107 = scmp.eq.s32.totalorder %s27, 2
      %p108 = por %p106, %p107
      %p109 = scmp.ne.s32.totalorder %s100, %s101
      %p110 = scmp.eq.s32.totalorder %s27, 0
      %p111 = por %p109, %p110
      %p112 = scmp.ne.s32.totalorder %s100, %s101
      %p113 = scmp.eq.s32.totalorder %s28, 2
      %p114 = por %p112, %p113
      %p116 = scmp.ne.s32.totalorder %s101, %s115
      %p117 = scmp.eq.s32.totalorder %s28, 0
      %p118 = por %p116, %p117
      %s120 = sadd.s32 %s119, 1
      %p123 = scmp.eq.s32.totalorder %s22, 2
      %p124 = scmp.ne.s32.totalorder %s119, %s121
      %p125 = scmp.eq.s32.totalorder %s22, 0
      %p126 = por %p124, %p125
      %p127 = scmp.ne.s32.totalorder %s119, %s121
      %p128 = scmp.eq.s32.totalorder %s27, 2
      %p129 = por %p127, %p128
      %p130 = scmp.ne.s32.totalorder %s121, %s122
      %p131 = scmp.eq.s32.totalorder %s27, 0
      %p132 = por %p130, %p131
      %p133 = scmp.ne.s32.totalorder %s121, %s122
      %p134 = scmp.eq.s32.totalorder %s28, 2
      %p135 = por %p133, %p134
      %p137 = scmp.ne.s32.totalorder %s122, %s136
      %p138 = scmp.eq.s32.totalorder %s28, 0
      %p139 = por %p137, %p138
      %s141 = sadd.s32 %s140, 1
      %p144 = scmp.eq.s32.totalorder %s22, 2
      %p145 = scmp.ne.s32.totalorder %s140, %s142
      %p146 = scmp.eq.s32.totalorder %s22, 0
      %p147 = por %p145, %p146
      %p148 = scmp.ne.s32.totalorder %s140, %s142
      %p149 = scmp.eq.s32.totalorder %s27, 2
      %p150 = por %p148, %p149
      %p151 = scmp.ne.s32.totalorder %s142, %s143
      %p152 = scmp.eq.s32.totalorder %s27, 0
      %p153 = por %p151, %p152
      %p154 = scmp.ne.s32.totalorder %s142, %s143
      %p155 = scmp.eq.s32.totalorder %s28, 2
      %p156 = por %p154, %p155
      %p158 = scmp.ne.s32.totalorder %s143, %s157
      %p159 = scmp.eq.s32.totalorder %s28, 0
      %p160 = por %p158, %p159
      %s162 = sadd.s32 %s161, 1
      %p165 = scmp.eq.s32.totalorder %s22, 2
      %p166 = scmp.ne.s32.totalorder %s161, %s163
      %p167 = scmp.eq.s32.totalorder %s22, 0
      %p168 = por %p166, %p167
      %p169 = scmp.ne.s32.totalorder %s161, %s163
      %p170 = scmp.eq.s32.totalorder %s27, 2
      %p171 = por %p169, %p170
      %p172 = scmp.ne.s32.totalorder %s163, %s164
      %p173 = scmp.eq.s32.totalorder %s27, 0
      %p174 = por %p172, %p173
      %p175 = scmp.ne.s32.totalorder %s163, %s164
      %p176 = scmp.eq.s32.totalorder %s28, 2
      %p177 = por %p175, %p176
      %p179 = scmp.ne.s32.totalorder %s164, %s178
      %p180 = scmp.eq.s32.totalorder %s28, 0
      %p181 = por %p179, %p180
      %s183 = sadd.s32 %s182, 1
      %p186 = scmp.eq.s32.totalorder %s22, 2
      %p187 = scmp.ne.s32.totalorder %s182, %s184
      %p188 = scmp.eq.s32.totalorder %s22, 0
      %p189 = por %p187, %p188
      %p190 = scmp.ne.s32.totalorder %s182, %s184
      %p191 = scmp.eq.s32.totalorder %s27, 2
      %p192 = por %p190, %p191
      %p193 = scmp.ne.s32.totalorder %s184, %s185
      %p194 = scmp.eq.s32.totalorder %s27, 0
      %p195 = por %p193, %p194
      %p196 = scmp.ne.s32.totalorder %s184, %s185
      %p197 = scmp.eq.s32.totalorder %s28, 2
      %p198 = por %p196, %p197
      %p200 = scmp.ne.s32.totalorder %s185, %s199
      %p201 = scmp.eq.s32.totalorder %s28, 0
      %p202 = por %p200, %p201
      %s204 = sadd.s32 %s203, 1
      %p207 = scmp.eq.s32.totalorder %s22, 2
      %p208 = scmp.ne.s32.totalorder %s203, %s205
      %p209 = scmp.eq.s32.totalorder %s22, 0
      %p210 = por %p208, %p209
      %p211 = scmp.ne.s32.totalorder %s203, %s205
      %p212 = scmp.eq.s32.totalorder %s27, 2
      %p213 = por %p211, %p212
      %p214 = scmp.ne.s32.totalorder %s205, %s206
      %p215 = scmp.eq.s32.totalorder %s27, 0
      %p216 = por %p214, %p215
      %p217 = scmp.ne.s32.totalorder %s205, %s206
      %p218 = scmp.eq.s32.totalorder %s28, 2
      %p219 = por %p217, %p218
      %p221 = scmp.ne.s32.totalorder %s206, %s220
      %p222 = scmp.eq.s32.totalorder %s28, 0
      %p223 = por %p221, %p222
      %s225 = sadd.s32 %s224, 1
      %p228 = scmp.eq.s32.totalorder %s22, 2
      %p229 = scmp.ne.s32.totalorder %s224, %s226
      %p230 = scmp.eq.s32.totalorder %s22, 0
      %p231 = por %p229, %p230
      %p232 = scmp.ne.s32.totalorder %s224, %s226
      %p233 = scmp.eq.s32.totalorder %s27, 2
      %p234 = por %p232, %p233
      %p235 = scmp.ne.s32.totalorder %s226, %s227
      %p236 = scmp.eq.s32.totalorder %s27, 0
      %p237 = por %p235, %p236
      %p238 = scmp.ne.s32.totalorder %s226, %s227
      %p239 = scmp.eq.s32.totalorder %s28, 2
      %p240 = por %p238, %p239
      %p242 = scmp.ne.s32.totalorder %s227, %s241
      %p243 = scmp.eq.s32.totalorder %s28, 0
      %p244 = por %p242, %p243
      %p245 = scmp.le.s32.totalorder 1, %s22
      %p246 = scmp.lt.s32.totalorder %s22, 4
      %p247 = pnand %p245, %p246
      %p248 = pneg %p247
      // Predicated region
      $region9: #{tpu_custom_call.1} parent=5 // pred_check
        _
      $region10: #{tpu_custom_call.1} parent=5 // pred_check_branch
        %250 = sbr.rel (%p247) target = $region12
      $region11: #{tpu_custom_call.1} parent=5 // pred_region
        %s251 = ssub.s32 %s22, 1
        // Predicated region
        $region13: #{tpu_custom_call.1} parent=11 // pred_check
          %p252 = pneg %p69
        $region14: #{tpu_custom_call.1} parent=11 // pred_check_branch
          %254 = sbr.rel (%p252) target = $region16
        $region15: #{tpu_custom_call.1} parent=11 // pred_region
          _
        $region16: #{tpu_custom_call.1} parent=11 // pred_fallthru
          _
        // Predicated region
        $region17: #{tpu_custom_call.1} parent=11 // pred_check
          %p255 = pneg %p90
        $region18: #{tpu_custom_call.1} parent=11 // pred_check_branch
          %257 = sbr.rel (%p255) target = $region20
        $region19: #{tpu_custom_call.1} parent=11 // pred_region
          _
        $region20: #{tpu_custom_call.1} parent=11 // pred_fallthru
          _
        // Predicated region
        $region21: #{tpu_custom_call.1} parent=11 // pred_check
          %p258 = pneg %p111
        $region22: #{tpu_custom_call.1} parent=11 // pred_check_branch
          %260 = sbr.rel (%p258) target = $region24
        $region23: #{tpu_custom_call.1} parent=11 // pred_region
          %s262 = ssub.s32 8192, 8192
          %263 = vsyncadd [#allocation10], %s262
          %s264 = sshll.u32 [#allocation9], 4
          %s265 = int_to_ptr.vmem [resolvable:$true] %s264
          %270 = dma.hbm_to_vmem [thread:$0]  %s3, 8192, %s265, [#allocation10], 128, 128, 8
        $region24: #{tpu_custom_call.1} parent=11 // pred_fallthru
          _
        // Predicated region
        $region25: #{tpu_custom_call.1} parent=11 // pred_check
          %p271 = pneg %p132
        $region26: #{tpu_custom_call.1} parent=11 // pred_check_branch
          %273 = sbr.rel (%p271) target = $region28
        $region27: #{tpu_custom_call.1} parent=11 // pred_region
          _
        $region28: #{tpu_custom_call.1} parent=11 // pred_fallthru
          _
        // Predicated region
        $region29: #{tpu_custom_call.1} parent=11 // pred_check
          %p274 = pneg %p153
        $region30: #{tpu_custom_call.1} parent=11 // pred_check_branch
          %276 = sbr.rel (%p274) target = $region32
        $region31: #{tpu_custom_call.1} parent=11 // pred_region
          _
        $region32: #{tpu_custom_call.1} parent=11 // pred_fallthru
          _
        // Predicated region
        $region33: #{tpu_custom_call.1} parent=11 // pred_check
          %p277 = pneg %p174
        $region34: #{tpu_custom_call.1} parent=11 // pred_check_branch
          %279 = sbr.rel (%p277) target = $region36
        $region35: #{tpu_custom_call.1} parent=11 // pred_region
          _
        $region36: #{tpu_custom_call.1} parent=11 // pred_fallthru
          _
        // Predicated region
        $region37: #{tpu_custom_call.1} parent=11 // pred_check
          %p280 = pneg %p195
        $region38: #{tpu_custom_call.1} parent=11 // pred_check_branch
          %282 = sbr.rel (%p280) target = $region40
        $region39: #{tpu_custom_call.1} parent=11 // pred_region
          _
        $region40: #{tpu_custom_call.1} parent=11 // pred_fallthru
          _
        // Predicated region
        $region41: #{tpu_custom_call.1} parent=11 // pred_check
          %p283 = pneg %p216
        $region42: #{tpu_custom_call.1} parent=11 // pred_check_branch
          %285 = sbr.rel (%p283) target = $region44
        $region43: #{tpu_custom_call.1} parent=11 // pred_region
          _
        $region44: #{tpu_custom_call.1} parent=11 // pred_fallthru
          _
      $region12: #{tpu_custom_call.1} parent=5 // pred_fallthru
        _
      %p286 = scmp.lt.s32.totalorder %s22, 3
      // Predicated region
      $region45: #{tpu_custom_call.1} parent=5 // pred_check
        %p287 = pneg %p286
      $region46: #{tpu_custom_call.1} parent=5 // pred_check_branch
        %289 = sbr.rel (%p287) target = $region48
      $region47: #{tpu_custom_call.1} parent=5 // pred_region
        // Predicated region
        $region49: #{tpu_custom_call.1} parent=47 // pred_check
          %p290 = pneg %p42
        $region50: #{tpu_custom_call.1} parent=47 // pred_check_branch
          %292 = sbr.rel (%p290) target = $region52
        $region51: #{tpu_custom_call.1} parent=47 // pred_region
          %s293 = sand.u32 %s32, 1
          %s294 = scalar_lea.sflag [#allocation7], %s293
          %s295 = sand.u32 %s32, 1
          %s296 = smul.addr %s295, 512
          %s297 = scalar_lea.vmem [#allocation6], %s296
          %s298 = smul.u32 16, %s22
          %s300 = ssub.s32 8192, 8192
          %301 = vsyncadd %s294, %s300
          %s302 = smul.addr %s298, 4
          %s303 = smul.addr %s302, 128
          %s304 = scalar_lea.hbm %s0, %s303
          %s305 = sshll.u32 %s297, 4
          %s306 = int_to_ptr.vmem [resolvable:$true] %s305
          %311 = dma.hbm_to_vmem [thread:$0]  %s304, 8192, %s306, %s294, 512, 512, 32
        $region52: #{tpu_custom_call.1} parent=47 // pred_fallthru
          _
      $region48: #{tpu_custom_call.1} parent=5 // pred_fallthru
        _
      %p312 = scmp.le.s32.totalorder 1, %s22
      %p313 = scmp.lt.s32.totalorder %s22, 4
      %p314 = pnand %p312, %p313
      %p315 = pneg %p314
      // Predicated region
      $region53: #{tpu_custom_call.1} parent=5 // pred_check
        _
      $region54: #{tpu_custom_call.1} parent=5 // pred_check_branch
        %317 = sbr.rel (%p314) target = $region56
      $region55: #{tpu_custom_call.1} parent=5 // pred_region
        %s318 = ssub.s32 %s22, 1
        %s319 = sand.u32 %s35, 1
        %s320 = scalar_lea.sflag [#allocation7], %s319
        %s321 = sand.u32 %s35, 1
        %s322 = smul.addr %s321, 512
        %s323 = scalar_lea.vmem [#allocation6], %s322
        // Predicated region
        $region57: #{tpu_custom_call.1} parent=55 // pred_check
          %p324 = pneg %p48
        $region58: #{tpu_custom_call.1} parent=55 // pred_check_branch
          %326 = sbr.rel (%p324) target = $region60
        $region59: #{tpu_custom_call.1} parent=55 // pred_region
          %327 = dma.done %s320, 8192
        $region60: #{tpu_custom_call.1} parent=55 // pred_fallthru
          _
        // Predicated region
        $region61: #{tpu_custom_call.1} parent=55 // pred_check
          %p328 = pneg %p111
        $region62: #{tpu_custom_call.1} parent=55 // pred_check_branch
          %330 = sbr.rel (%p328) target = $region64
        $region63: #{tpu_custom_call.1} parent=55 // pred_region
          %331 = dma.done [#allocation10], 8192
        $region64: #{tpu_custom_call.1} parent=55 // pred_fallthru
          _
        %s332 = sand.u32 %s35, 1
        %s333 = scalar_lea.sflag [#allocation7], %s332
        %s334 = sand.u32 %s35, 1
        %s335 = smul.addr %s334, 512
        %s336 = scalar_lea.vmem [#allocation6], %s335
        %p337 = pneg %p48
        %p338 = pneg %p45
        %p339 = pneg %p69
        %p340 = pneg %p66
        %p341 = pneg %p90
        %p342 = pneg %p87
        %p343 = pneg %p111
        %p344 = pneg %p108
        %p345 = pneg %p132
        %p346 = pneg %p129
        %p347 = pneg %p153
        %p348 = pneg %p150
        %p349 = pneg %p174
        %p350 = pneg %p171
        %p351 = pneg %p195
        %p352 = pneg %p192
        %p353 = pneg %p216
        %p354 = pneg %p213
        %p355 = pneg %p237
        %p356 = pneg %p234
        %s357 = smul.u32 16, %s27
        %p358 = scmp.eq.s32.totalorder %s27, 0
        // Predicated region
        $region65: #{tpu_custom_call.1} parent=55 // pred_check
          %p359 = pneg %p358
        $region66: #{tpu_custom_call.1} parent=55 // pred_check_branch
          %361 = sbr.rel (%p359) target = $region68
        $region67: #{tpu_custom_call.1} parent=55 // pred_region
          %vm362 = vcmask 0
          %363 = vst.msk [vmem:[#allocation2] sm:$0x1] %vm362, -inf
          %364 = vst.msk [vmem:[#allocation3] sm:$0x1] %vm362, 0.0
          %v365 = vlaneseq
          %vm366 = vcmp.ge.s32.totalorder %v365, 0
          %vm367 = vcmp.lt.s32.totalorder %v365, 512
          %vm368 = vmand %vm366, %vm367
          %369 = vst.msk [vmem:[#allocation4] sm:$0xf] %vm368, 0.0
        $region68: #{tpu_custom_call.1} parent=55 // pred_fallthru
          _
        %v370 = vld [vmem:[%s323] sm:$0xff]
        %v371 = vld [vmem:[%s323 + $0x8] sm:$0xff]
        %v372 = vld [vmem:[%s323 + $0x10] sm:$0xff]
        %v373 = vld [vmem:[%s323 + $0x18] sm:$0xff]
        %v374 = vld [vmem:[%s323 + $0x20] sm:$0xff]
        %v375 = vld [vmem:[%s323 + $0x28] sm:$0xff]
        %v376 = vld [vmem:[%s323 + $0x30] sm:$0xff]
        %v377 = vld [vmem:[%s323 + $0x38] sm:$0xff]
        %v378 = vld [vmem:[%s323 + $0x40] sm:$0xff]
        %v379 = vld [vmem:[%s323 + $0x48] sm:$0xff]
        %v380 = vld [vmem:[%s323 + $0x50] sm:$0xff]
        %v381 = vld [vmem:[%s323 + $0x58] sm:$0xff]
        %v382 = vld [vmem:[%s323 + $0x60] sm:$0xff]
        %v383 = vld [vmem:[%s323 + $0x68] sm:$0xff]
        %v384 = vld [vmem:[%s323 + $0x70] sm:$0xff]
        %v385 = vld [vmem:[%s323 + $0x78] sm:$0xff]
        %v386 = vld [vmem:[%s323 + $0x80] sm:$0xff]
        %v387 = vld [vmem:[%s323 + $0x88] sm:$0xff]
        %v388 = vld [vmem:[%s323 + $0x90] sm:$0xff]
        %v389 = vld [vmem:[%s323 + $0x98] sm:$0xff]
        %v390 = vld [vmem:[%s323 + $0xa0] sm:$0xff]
        %v391 = vld [vmem:[%s323 + $0xa8] sm:$0xff]
        %v392 = vld [vmem:[%s323 + $0xb0] sm:$0xff]
        %v393 = vld [vmem:[%s323 + $0xb8] sm:$0xff]
        %v394 = vld [vmem:[%s323 + $0xc0] sm:$0xff]
        %v395 = vld [vmem:[%s323 + $0xc8] sm:$0xff]
        %v396 = vld [vmem:[%s323 + $0xd0] sm:$0xff]
        %v397 = vld [vmem:[%s323 + $0xd8] sm:$0xff]
        %v398 = vld [vmem:[%s323 + $0xe0] sm:$0xff]
        %v399 = vld [vmem:[%s323 + $0xe8] sm:$0xff]
        %v400 = vld [vmem:[%s323 + $0xf0] sm:$0xff]
        %v401 = vld [vmem:[%s323 + $0xf8] sm:$0xff]
        %v402 = vld [vmem:[%s323 + $0x100] sm:$0xff]
        %v403 = vld [vmem:[%s323 + $0x108] sm:$0xff]
        %v404 = vld [vmem:[%s323 + $0x110] sm:$0xff]
        %v405 = vld [vmem:[%s323 + $0x118] sm:$0xff]
        %v406 = vld [vmem:[%s323 + $0x120] sm:$0xff]
        %v407 = vld [vmem:[%s323 + $0x128] sm:$0xff]
        %v408 = vld [vmem:[%s323 + $0x130] sm:$0xff]
        %v409 = vld [vmem:[%s323 + $0x138] sm:$0xff]
        %v410 = vld [vmem:[%s323 + $0x140] sm:$0xff]
        %v411 = vld [vmem:[%s323 + $0x148] sm:$0xff]
        %v412 = vld [vmem:[%s323 + $0x150] sm:$0xff]
        %v413 = vld [vmem:[%s323 + $0x158] sm:$0xff]
        %v414 = vld [vmem:[%s323 + $0x160] sm:$0xff]
        %v415 = vld [vmem:[%s323 + $0x168] sm:$0xff]
        %v416 = vld [vmem:[%s323 + $0x170] sm:$0xff]
        %v417 = vld [vmem:[%s323 + $0x178] sm:$0xff]
        %v418 = vld [vmem:[%s323 + $0x180] sm:$0xff]
        %v419 = vld [vmem:[%s323 + $0x188] sm:$0xff]
        %v420 = vld [vmem:[%s323 + $0x190] sm:$0xff]
        %v421 = vld [vmem:[%s323 + $0x198] sm:$0xff]
        %v422 = vld [vmem:[%s323 + $0x1a0] sm:$0xff]
        %v423 = vld [vmem:[%s323 + $0x1a8] sm:$0xff]
        %v424 = vld [vmem:[%s323 + $0x1b0] sm:$0xff]
        %v425 = vld [vmem:[%s323 + $0x1b8] sm:$0xff]
        %v426 = vld [vmem:[%s323 + $0x1c0] sm:$0xff]
        %v427 = vld [vmem:[%s323 + $0x1c8] sm:$0xff]
        %v428 = vld [vmem:[%s323 + $0x1d0] sm:$0xff]
        %v429 = vld [vmem:[%s323 + $0x1d8] sm:$0xff]
        %v430 = vld [vmem:[%s323 + $0x1e0] sm:$0xff]
        %v431 = vld [vmem:[%s323 + $0x1e8] sm:$0xff]
        %v432 = vld [vmem:[%s323 + $0x1f0] sm:$0xff]
        %v433 = vld [vmem:[%s323 + $0x1f8] sm:$0xff]
        %v434 = vld [vmem:[%s1] sm:$0xff]
        %v435 = vld [vmem:[%s1 + $0x8] sm:$0xff]
        %v436 = vld [vmem:[%s1 + $0x10] sm:$0xff]
        %v437 = vld [vmem:[%s1 + $0x18] sm:$0xff]
        %v438 = vld [vmem:[%s1 + $0x20] sm:$0xff]
        %v439 = vld [vmem:[%s1 + $0x28] sm:$0xff]
        %v440 = vld [vmem:[%s1 + $0x30] sm:$0xff]
        %v441 = vld [vmem:[%s1 + $0x38] sm:$0xff]
        %v442 = vld [vmem:[%s1 + $0x40] sm:$0xff]
        %v443 = vld [vmem:[%s1 + $0x48] sm:$0xff]
        %v444 = vld [vmem:[%s1 + $0x50] sm:$0xff]
        %v445 = vld [vmem:[%s1 + $0x58] sm:$0xff]
        %v446 = vld [vmem:[%s1 + $0x60] sm:$0xff]
        %v447 = vld [vmem:[%s1 + $0x68] sm:$0xff]
        %v448 = vld [vmem:[%s1 + $0x70] sm:$0xff]
        %v449 = vld [vmem:[%s1 + $0x78] sm:$0xff]
        %v450 = vld [vmem:[%s1 + $0x80] sm:$0xff]
        %v451 = vld [vmem:[%s1 + $0x88] sm:$0xff]
        %v452 = vld [vmem:[%s1 + $0x90] sm:$0xff]
        %v453 = vld [vmem:[%s1 + $0x98] sm:$0xff]
        %v454 = vld [vmem:[%s1 + $0xa0] sm:$0xff]
        %v455 = vld [vmem:[%s1 + $0xa8] sm:$0xff]
        %v456 = vld [vmem:[%s1 + $0xb0] sm:$0xff]
        %v457 = vld [vmem:[%s1 + $0xb8] sm:$0xff]
        %v458 = vld [vmem:[%s1 + $0xc0] sm:$0xff]
        %v459 = vld [vmem:[%s1 + $0xc8] sm:$0xff]
        %v460 = vld [vmem:[%s1 + $0xd0] sm:$0xff]
        %v461 = vld [vmem:[%s1 + $0xd8] sm:$0xff]
        %v462 = vld [vmem:[%s1 + $0xe0] sm:$0xff]
        %v463 = vld [vmem:[%s1 + $0xe8] sm:$0xff]
        %v464 = vld [vmem:[%s1 + $0xf0] sm:$0xff]
        %v465 = vld [vmem:[%s1 + $0xf8] sm:$0xff]
        %v466 = vld [vmem:[%s1 + $0x100] sm:$0xff]
        %v467 = vld [vmem:[%s1 + $0x108] sm:$0xff]
        %v468 = vld [vmem:[%s1 + $0x110] sm:$0xff]
        %v469 = vld [vmem:[%s1 + $0x118] sm:$0xff]
        %v470 = vld [vmem:[%s1 + $0x120] sm:$0xff]
        %v471 = vld [vmem:[%s1 + $0x128] sm:$0xff]
        %v472 = vld [vmem:[%s1 + $0x130] sm:$0xff]
        %v473 = vld [vmem:[%s1 + $0x138] sm:$0xff]
        %v474 = vld [vmem:[%s1 + $0x140] sm:$0xff]
        %v475 = vld [vmem:[%s1 + $0x148] sm:$0xff]
        %v476 = vld [vmem:[%s1 + $0x150] sm:$0xff]
        %v477 = vld [vmem:[%s1 + $0x158] sm:$0xff]
        %v478 = vld [vmem:[%s1 + $0x160] sm:$0xff]
        %v479 = vld [vmem:[%s1 + $0x168] sm:$0xff]
        %v480 = vld [vmem:[%s1 + $0x170] sm:$0xff]
        %v481 = vld [vmem:[%s1 + $0x178] sm:$0xff]
        %v482 = vld [vmem:[%s1 + $0x180] sm:$0xff]
        %v483 = vld [vmem:[%s1 + $0x188] sm:$0xff]
        %v484 = vld [vmem:[%s1 + $0x190] sm:$0xff]
        %v485 = vld [vmem:[%s1 + $0x198] sm:$0xff]
        %v486 = vld [vmem:[%s1 + $0x1a0] sm:$0xff]
        %v487 = vld [vmem:[%s1 + $0x1a8] sm:$0xff]
        %v488 = vld [vmem:[%s1 + $0x1b0] sm:$0xff]
        %v489 = vld [vmem:[%s1 + $0x1b8] sm:$0xff]
        %v490 = vld [vmem:[%s1 + $0x1c0] sm:$0xff]
        %v491 = vld [vmem:[%s1 + $0x1c8] sm:$0xff]
        %v492 = vld [vmem:[%s1 + $0x1d0] sm:$0xff]
        %v493 = vld [vmem:[%s1 + $0x1d8] sm:$0xff]
        %v494 = vld [vmem:[%s1 + $0x1e0] sm:$0xff]
        %v495 = vld [vmem:[%s1 + $0x1e8] sm:$0xff]
        %v496 = vld [vmem:[%s1 + $0x1f0] sm:$0xff]
        %v497 = vld [vmem:[%s1 + $0x1f8] sm:$0xff]
        %v498 = vld [vmem:[%s2] sm:$0x1]
        %v500 = vlaneseq
        %v501 = vshrl.u32 %v500, 7
        %v502 = vsub.s32 0, %v501
        %v503 = vrot.slane %v498, %v502
        %505 = vmatprep.subr.mxu0 0.0
        %506 = vmatpush1.msra.mxu0 %v434
        %507 = vmatprep.subr.mxu0 0.0
        %508 = vmatpush1.msra.mxu0 %v435
        %509 = vmatprep.subr.mxu0 0.0
        %510 = vmatpush1.msra.mxu0 %v436
        %511 = vmatprep.subr.mxu0 0.0
        %512 = vmatpush1.msra.mxu0 %v437
        %513 = vmatprep.subr.mxu0 0.0
        %514 = vmatpush1.msra.mxu0 %v438
        %515 = vmatprep.subr.mxu0 0.0
        %516 = vmatpush1.msra.mxu0 %v439
        %517 = vmatprep.subr.mxu0 0.0
        %518 = vmatpush1.msra.mxu0 %v440
        %519 = vmatprep.subr.mxu0 0.0
        %520 = vmatpush1.msra.mxu0 %v441
        %521 = vmatprep.subr.mxu0 0.0
        %522 = vmatpush1.msra.mxu0 %v442
        %523 = vmatprep.subr.mxu0 0.0
        %524 = vmatpush1.msra.mxu0 %v443
        %525 = vmatprep.subr.mxu0 0.0
        %526 = vmatpush1.msra.mxu0 %v444
        %527 = vmatprep.subr.mxu0 0.0
        %528 = vmatpush1.msra.mxu0 %v445
        %529 = vmatprep.subr.mxu0 0.0
        %530 = vmatpush1.msra.mxu0 %v446
        %531 = vmatprep.subr.mxu0 0.0
        %532 = vmatpush1.msra.mxu0 %v447
        %533 = vmatprep.subr.mxu0 0.0
        %534 = vmatpush1.msra.mxu0 %v448
        %535 = vmatprep.subr.mxu0 0.0
        %536 = vmatpush1.msra.mxu0 %v449
        %537 = vmatprep.subr.mxu0 0.0
        %538 = vmatpush1.msra.mxu0 %v450
        %539 = vmatprep.subr.mxu0 0.0
        %540 = vmatpush1.msra.mxu0 %v451
        %541 = vmatprep.subr.mxu0 0.0
        %542 = vmatpush1.msra.mxu0 %v452
        %543 = vmatprep.subr.mxu0 0.0
        %544 = vmatpush1.msra.mxu0 %v453
        %545 = vmatprep.subr.mxu0 0.0
        %546 = vmatpush1.msra.mxu0 %v454
        %547 = vmatprep.subr.mxu0 0.0
        %548 = vmatpush1.msra.mxu0 %v455
        %549 = vmatprep.subr.mxu0 0.0
        %550 = vmatpush1.msra.mxu0 %v456
        %551 = vmatprep.subr.mxu0 0.0
        %552 = vmatpush1.msra.mxu0 %v457
        %553 = vmatprep.subr.mxu0 0.0
        %554 = vmatpush1.msra.mxu0 %v458
        %555 = vmatprep.subr.mxu0 0.0
        %556 = vmatpush1.msra.mxu0 %v459
        %557 = vmatprep.subr.mxu0 0.0
        %558 = vmatpush1.msra.mxu0 %v460
        %559 = vmatprep.subr.mxu0 0.0
        %560 = vmatpush1.msra.mxu0 %v461
        %561 = vmatprep.subr.mxu0 0.0
        %562 = vmatpush1.msra.mxu0 %v462
        %563 = vmatprep.subr.mxu0 0.0
        %564 = vmatpush1.msra.mxu0 %v463
        %565 = vmatprep.subr.mxu0 0.0
        %566 = vmatpush1.msra.mxu0 %v464
        %567 = vmatprep.subr.mxu0 0.0
        %568 = vmatpush1.msra.mxu0 %v465
        %569 = vmatprep.mubr.f32.mxu0 %v371
        %570 = vmatmul.mubr.f32.gmra.mrb[0].mxu0 %v370
        %v571 = vpop.f32.mrb[0].mxu0
        %v572 = vadd.f32 %v503, %v571
        %v573 = vpop.f32.mrb[0].mxu0
        %574 = vmatprep.mubr.f32.mxu0 %v375
        %575 = vmatmul.mubr.f32.gmra.mrb[0].mxu0 %v374
        %v576 = vpop.f32.mrb[0].mxu0
        %v577 = vadd.f32 %v503, %v576
        %v578 = vpop.f32.mrb[0].mxu0
        %579 = vmatprep.mubr.f32.mxu0 %v379
        %580 = vmatmul.mubr.f32.gmra.mrb[0].mxu0 %v378
        %v581 = vpop.f32.mrb[0].mxu0
        %v582 = vadd.f32 %v503, %v581
        %v583 = vpop.f32.mrb[0].mxu0
        %584 = vmatprep.mubr.f32.mxu0 %v383
        %585 = vmatmul.mubr.f32.gmra.mrb[0].mxu0 %v382
        %v586 = vpop.f32.mrb[0].mxu0
        %v587 = vadd.f32 %v503, %v586
        %v588 = vpop.f32.mrb[0].mxu0
        %589 = vmatprep.mubr.f32.mxu0 %v387
        %590 = vmatmul.mubr.f32.gmra.mrb[0].mxu0 %v386
        %v591 = vpop.f32.mrb[0].mxu0
        %v592 = vadd.f32 %v503, %v591
        %v593 = vpop.f32.mrb[0].mxu0
        %594 = vmatprep.mubr.f32.mxu0 %v391
        %595 = vmatmul.mubr.f32.gmra.mrb[0].mxu0 %v390
        %v596 = vpop.f32.mrb[0].mxu0
        %v597 = vadd.f32 %v503, %v596
        %v598 = vpop.f32.mrb[0].mxu0
        %599 = vmatprep.mubr.f32.mxu0 %v395
        %600 = vmatmul.mubr.f32.gmra.mrb[0].mxu0 %v394
        %v601 = vpop.f32.mrb[0].mxu0
        %v602 = vadd.f32 %v503, %v601
        %v603 = vpop.f32.mrb[0].mxu0
        %604 = vmatprep.mubr.f32.mxu0 %v399
        %605 = vmatmul.mubr.f32.gmra.mrb[0].mxu0 %v398
        %v606 = vpop.f32.mrb[0].mxu0
        %v607 = vadd.f32 %v503, %v606
        %v608 = vpop.f32.mrb[0].mxu0
        %609 = vmatprep.mubr.f32.mxu0 %v403
        %610 = vmatmul.mubr.f32.gmra.mrb[0].mxu0 %v402
        %v611 = vpop.f32.mrb[0].mxu0
        %v612 = vadd.f32 %v503, %v611
        %v613 = vpop.f32.mrb[0].mxu0
        %614 = vmatprep.mubr.f32.mxu0 %v407
        %615 = vmatmul.mubr.f32.gmra.mrb[0].mxu0 %v406
        %v616 = vpop.f32.mrb[0].mxu0
        %v617 = vadd.f32 %v503, %v616
        %v618 = vpop.f32.mrb[0].mxu0
        %619 = vmatprep.mubr.f32.mxu0 %v411
        %620 = vmatmul.mubr.f32.gmra.mrb[0].mxu0 %v410
        %v621 = vpop.f32.mrb[0].mxu0
        %v622 = vadd.f32 %v503, %v621
        %v623 = vpop.f32.mrb[0].mxu0
        %624 = vmatprep.mubr.f32.mxu0 %v415
        %625 = vmatmul.mubr.f32.gmra.mrb[0].mxu0 %v414
        %v626 = vpop.f32.mrb[0].mxu0
        %v627 = vadd.f32 %v503, %v626
        %v628 = vpop.f32.mrb[0].mxu0
        %629 = vmatprep.mubr.f32.mxu0 %v419
        %630 = vmatmul.mubr.f32.gmra.mrb[0].mxu0 %v418
        %v631 = vpop.f32.mrb[0].mxu0
        %v632 = vadd.f32 %v503, %v631
        %v633 = vpop.f32.mrb[0].mxu0
        %634 = vmatprep.mubr.f32.mxu0 %v423
        %635 = vmatmul.mubr.f32.gmra.mrb[0].mxu0 %v422
        %v636 = vpop.f32.mrb[0].mxu0
        %v637 = vadd.f32 %v503, %v636
        %v638 = vpop.f32.mrb[0].mxu0
        %639 = vmatprep.mubr.f32.mxu0 %v427
        %640 = vmatmul.mubr.f32.gmra.mrb[0].mxu0 %v426
        %v641 = vpop.f32.mrb[0].mxu0
        %v642 = vadd.f32 %v503, %v641
        %v643 = vpop.f32.mrb[0].mxu0
        %644 = vmatprep.mubr.f32.mxu0 %v431
        %645 = vmatmul.mubr.f32.gmra.mrb[0].mxu0 %v430
        %v646 = vpop.f32.mrb[0].mxu0
        %v647 = vadd.f32 %v503, %v646
        %v648 = vpop.f32.mrb[0].mxu0
        %649 = vdwg.mxu0
        %650 = vmatprep.subr.mxu0 0.0
        %651 = vmatpush1.msra.mxu0 %v466
        %652 = vmatprep.subr.mxu0 0.0
        %653 = vmatpush1.msra.mxu0 %v467
        %654 = vmatprep.subr.mxu0 0.0
        %655 = vmatpush1.msra.mxu0 %v468
        %656 = vmatprep.subr.mxu0 0.0
        %657 = vmatpush1.msra.mxu0 %v469
        %658 = vmatprep.subr.mxu0 0.0
        %659 = vmatpush1.msra.mxu0 %v470
        %660 = vmatprep.subr.mxu0 0.0
        %661 = vmatpush1.msra.mxu0 %v471
        %662 = vmatprep.subr.mxu0 0.0
        %663 = vmatpush1.msra.mxu0 %v472
        %664 = vmatprep.subr.mxu0 0.0
        %665 = vmatpush1.msra.mxu0 %v473
        %666 = vmatprep.subr.mxu0 0.0
        %667 = vmatpush1.msra.mxu0 %v474
        %668 = vmatprep.subr.mxu0 0.0
        %669 = vmatpush1.msra.mxu0 %v475
        %670 = vmatprep.subr.mxu0 0.0
        %671 = vmatpush1.msra.mxu0 %v476
        %672 = vmatprep.subr.mxu0 0.0
        %673 = vmatpush1.msra.mxu0 %v477
        %674 = vmatprep.subr.mxu0 0.0
        %675 = vmatpush1.msra.mxu0 %v478
        %676 = vmatprep.subr.mxu0 0.0
        %677 = vmatpush1.msra.mxu0 %v479
        %678 = vmatprep.subr.mxu0 0.0
        %679 = vmatpush1.msra.mxu0 %v480
        %680 = vmatprep.subr.mxu0 0.0
        %681 = vmatpush1.msra.mxu0 %v481
        %682 = vmatprep.subr.mxu0 0.0
        %683 = vmatpush1.msra.mxu0 %v482
        %684 = vmatprep.subr.mxu0 0.0
        %685 = vmatpush1.msra.mxu0 %v483
        %686 = vmatprep.subr.mxu0 0.0
        %687 = vmatpush1.msra.mxu0 %v484
        %688 = vmatprep.subr.mxu0 0.0
        %689 = vmatpush1.msra.mxu0 %v485
        %690 = vmatprep.subr.mxu0 0.0
        %691 = vmatpush1.msra.mxu0 %v486
        %692 = vmatprep.subr.mxu0 0.0
        %693 = vmatpush1.msra.mxu0 %v487
        %694 = vmatprep.subr.mxu0 0.0
        %695 = vmatpush1.msra.mxu0 %v488
        %696 = vmatprep.subr.mxu0 0.0
        %697 = vmatpush1.msra.mxu0 %v489
        %698 = vmatprep.subr.mxu0 0.0
        %699 = vmatpush1.msra.mxu0 %v490
        %700 = vmatprep.subr.mxu0 0.0
        %701 = vmatpush1.msra.mxu0 %v491
        %702 = vmatprep.subr.mxu0 0.0
        %703 = vmatpush1.msra.mxu0 %v492
        %704 = vmatprep.subr.mxu0 0.0
        %705 = vmatpush1.msra.mxu0 %v493
        %706 = vmatprep.subr.mxu0 0.0
        %707 = vmatpush1.msra.mxu0 %v494
        %708 = vmatprep.subr.mxu0 0.0
        %709 = vmatpush1.msra.mxu0 %v495
        %710 = vmatprep.subr.mxu0 0.0
        %711 = vmatpush1.msra.mxu0 %v496
        %712 = vmatprep.subr.mxu0 0.0
        %713 = vmatpush1.msra.mxu0 %v497
        %714 = vmatprep.mubr.f32.mxu0 %v373
        %715 = vmatmul.mubr.f32.gmra.mrb[0].mxu0 %v372
        %v716 = vpop.f32.mrb[0].mxu0
        %v717 = vadd.f32 %v572, %v716
        %v718 = vpop.f32.mrb[0].mxu0
        %719 = vmatprep.mubr.f32.mxu0 %v377
        %720 = vmatmul.mubr.f32.gmra.mrb[0].mxu0 %v376
        %v721 = vpop.f32.mrb[0].mxu0
        %v722 = vadd.f32 %v577, %v721
        %v723 = vpop.f32.mrb[0].mxu0
        %724 = vmatprep.mubr.f32.mxu0 %v381
        %725 = vmatmul.mubr.f32.gmra.mrb[0].mxu0 %v380
        %v726 = vpop.f32.mrb[0].mxu0
        %v727 = vadd.f32 %v582, %v726
        %v728 = vpop.f32.mrb[0].mxu0
        %729 = vmatprep.mubr.f32.mxu0 %v385
        %730 = vmatmul.mubr.f32.gmra.mrb[0].mxu0 %v384
        %v731 = vpop.f32.mrb[0].mxu0
        %v732 = vadd.f32 %v587, %v731
        %v733 = vpop.f32.mrb[0].mxu0
        %734 = vmatprep.mubr.f32.mxu0 %v389
        %735 = vmatmul.mubr.f32.gmra.mrb[0].mxu0 %v388
        %v736 = vpop.f32.mrb[0].mxu0
        %v737 = vadd.f32 %v592, %v736
        %v738 = vpop.f32.mrb[0].mxu0
        %739 = vmatprep.mubr.f32.mxu0 %v393
        %740 = vmatmul.mubr.f32.gmra.mrb[0].mxu0 %v392
        %v741 = vpop.f32.mrb[0].mxu0
        %v742 = vadd.f32 %v597, %v741
        %v743 = vpop.f32.mrb[0].mxu0
        %744 = vmatprep.mubr.f32.mxu0 %v397
        %745 = vmatmul.mubr.f32.gmra.mrb[0].mxu0 %v396
        %v746 = vpop.f32.mrb[0].mxu0
        %v747 = vadd.f32 %v602, %v746
        %v748 = vpop.f32.mrb[0].mxu0
        %749 = vmatprep.mubr.f32.mxu0 %v401
        %750 = vmatmul.mubr.f32.gmra.mrb[0].mxu0 %v400
        %v751 = vpop.f32.mrb[0].mxu0
        %v752 = vadd.f32 %v607, %v751
        %v753 = vpop.f32.mrb[0].mxu0
        %754 = vmatprep.mubr.f32.mxu0 %v405
        %755 = vmatmul.mubr.f32.gmra.mrb[0].mxu0 %v404
        %v756 = vpop.f32.mrb[0].mxu0
        %v757 = vadd.f32 %v612, %v756
        %v758 = vpop.f32.mrb[0].mxu0
        %759 = vmatprep.mubr.f32.mxu0 %v409
        %760 = vmatmul.mubr.f32.gmra.mrb[0].mxu0 %v408
        %v761 = vpop.f32.mrb[0].mxu0
        %v762 = vadd.f32 %v617, %v761
        %v763 = vpop.f32.mrb[0].mxu0
        %764 = vmatprep.mubr.f32.mxu0 %v413
        %765 = vmatmul.mubr.f32.gmra.mrb[0].mxu0 %v412
        %v766 = vpop.f32.mrb[0].mxu0
        %v767 = vadd.f32 %v622, %v766
        %v768 = vpop.f32.mrb[0].mxu0
        %769 = vmatprep.mubr.f32.mxu0 %v417
        %770 = vmatmul.mubr.f32.gmra.mrb[0].mxu0 %v416
        %v771 = vpop.f32.mrb[0].mxu0
        %v772 = vadd.f32 %v627, %v771
        %v773 = vpop.f32.mrb[0].mxu0
        %774 = vmatprep.mubr.f32.mxu0 %v421
        %775 = vmatmul.mubr.f32.gmra.mrb[0].mxu0 %v420
        %v776 = vpop.f32.mrb[0].mxu0
        %v777 = vadd.f32 %v632, %v776
        %v778 = vpop.f32.mrb[0].mxu0
        %779 = vmatprep.mubr.f32.mxu0 %v425
        %780 = vmatmul.mubr.f32.gmra.mrb[0].mxu0 %v424
        %v781 = vpop.f32.mrb[0].mxu0
        %v782 = vadd.f32 %v637, %v781
        %v783 = vpop.f32.mrb[0].mxu0
        %784 = vmatprep.mubr.f32.mxu0 %v429
        %785 = vmatmul.mubr.f32.gmra.mrb[0].mxu0 %v428
        %v786 = vpop.f32.mrb[0].mxu0
        %v787 = vadd.f32 %v642, %v786
        %v788 = vpop.f32.mrb[0].mxu0
        %789 = vmatprep.mubr.f32.mxu0 %v433
        %790 = vmatmul.mubr.f32.gmra.mrb[0].mxu0 %v432
        %v791 = vpop.f32.mrb[0].mxu0
        %v792 = vadd.f32 %v647, %v791
        %v793 = vpop.f32.mrb[0].mxu0
        %794 = vdwg.mxu0
        %v795 = vtanh.pop %v717
        %v796 = vtanh.pop %v722
        %v797 = vtanh.pop %v727
        %v798 = vtanh.pop %v732
        %v799 = vtanh.pop %v737
        %v800 = vtanh.pop %v742
        %v801 = vtanh.pop %v747
        %v802 = vtanh.pop %v752
        %v803 = vtanh.pop %v757
        %v804 = vtanh.pop %v762
        %v805 = vtanh.pop %v767
        %v806 = vtanh.pop %v772
        %v807 = vtanh.pop %v777
        %v808 = vtanh.pop %v782
        %v809 = vtanh.pop %v787
        %v810 = vtanh.pop %v792
        %v811 = vld [vmem:[#allocation9] sm:$0xff]
        %v812 = vld [vmem:[#allocation9 + $0x8] sm:$0xff]
        %v813 = vld [vmem:[#allocation9 + $0x10] sm:$0xff]
        %v814 = vld [vmem:[#allocation9 + $0x18] sm:$0xff]
        %v815 = vld [vmem:[#allocation9 + $0x20] sm:$0xff]
        %v816 = vld [vmem:[#allocation9 + $0x28] sm:$0xff]
        %v817 = vld [vmem:[#allocation9 + $0x30] sm:$0xff]
        %v818 = vld [vmem:[#allocation9 + $0x38] sm:$0xff]
        %v819 = vld [vmem:[#allocation9 + $0x40] sm:$0xff]
        %v820 = vld [vmem:[#allocation9 + $0x48] sm:$0xff]
        %v821 = vld [vmem:[#allocation9 + $0x50] sm:$0xff]
        %v822 = vld [vmem:[#allocation9 + $0x58] sm:$0xff]
        %v823 = vld [vmem:[#allocation9 + $0x60] sm:$0xff]
        %v824 = vld [vmem:[#allocation9 + $0x68] sm:$0xff]
        %v825 = vld [vmem:[#allocation9 + $0x70] sm:$0xff]
        %v826 = vld [vmem:[#allocation9 + $0x78] sm:$0xff]
        %v827 = vld [vmem:[#allocation9 + $0x80] sm:$0xff]
        %v828 = vld [vmem:[#allocation9 + $0x88] sm:$0xff]
        %v829 = vld [vmem:[#allocation9 + $0x90] sm:$0xff]
        %v830 = vld [vmem:[#allocation9 + $0x98] sm:$0xff]
        %v831 = vld [vmem:[#allocation9 + $0xa0] sm:$0xff]
        %v832 = vld [vmem:[#allocation9 + $0xa8] sm:$0xff]
        %v833 = vld [vmem:[#allocation9 + $0xb0] sm:$0xff]
        %v834 = vld [vmem:[#allocation9 + $0xb8] sm:$0xff]
        %v835 = vld [vmem:[#allocation9 + $0xc0] sm:$0xff]
        %v836 = vld [vmem:[#allocation9 + $0xc8] sm:$0xff]
        %v837 = vld [vmem:[#allocation9 + $0xd0] sm:$0xff]
        %v838 = vld [vmem:[#allocation9 + $0xd8] sm:$0xff]
        %v839 = vld [vmem:[#allocation9 + $0xe0] sm:$0xff]
        %v840 = vld [vmem:[#allocation9 + $0xe8] sm:$0xff]
        %v841 = vld [vmem:[#allocation9 + $0xf0] sm:$0xff]
        %v842 = vld [vmem:[#allocation9 + $0xf8] sm:$0xff]
        %v843 = vld [vmem:[#allocation9 + $0x100] sm:$0xff]
        %v844 = vld [vmem:[#allocation9 + $0x108] sm:$0xff]
        %v845 = vld [vmem:[#allocation9 + $0x110] sm:$0xff]
        %v846 = vld [vmem:[#allocation9 + $0x118] sm:$0xff]
        %v847 = vld [vmem:[#allocation9 + $0x120] sm:$0xff]
        %v848 = vld [vmem:[#allocation9 + $0x128] sm:$0xff]
        %v849 = vld [vmem:[#allocation9 + $0x130] sm:$0xff]
        %v850 = vld [vmem:[#allocation9 + $0x138] sm:$0xff]
        %v851 = vld [vmem:[#allocation9 + $0x140] sm:$0xff]
        %v852 = vld [vmem:[#allocation9 + $0x148] sm:$0xff]
        %v853 = vld [vmem:[#allocation9 + $0x150] sm:$0xff]
        %v854 = vld [vmem:[#allocation9 + $0x158] sm:$0xff]
        %v855 = vld [vmem:[#allocation9 + $0x160] sm:$0xff]
        %v856 = vld [vmem:[#allocation9 + $0x168] sm:$0xff]
        %v857 = vld [vmem:[#allocation9 + $0x170] sm:$0xff]
        %v858 = vld [vmem:[#allocation9 + $0x178] sm:$0xff]
        %v859 = vld [vmem:[#allocation9 + $0x180] sm:$0xff]
        %v860 = vld [vmem:[#allocation9 + $0x188] sm:$0xff]
        %v861 = vld [vmem:[#allocation9 + $0x190] sm:$0xff]
        %v862 = vld [vmem:[#allocation9 + $0x198] sm:$0xff]
        %v863 = vld [vmem:[#allocation9 + $0x1a0] sm:$0xff]
        %v864 = vld [vmem:[#allocation9 + $0x1a8] sm:$0xff]
        %v865 = vld [vmem:[#allocation9 + $0x1b0] sm:$0xff]
        %v866 = vld [vmem:[#allocation9 + $0x1b8] sm:$0xff]
        %v867 = vld [vmem:[#allocation9 + $0x1c0] sm:$0xff]
        %v868 = vld [vmem:[#allocation9 + $0x1c8] sm:$0xff]
        %v869 = vld [vmem:[#allocation9 + $0x1d0] sm:$0xff]
        %v870 = vld [vmem:[#allocation9 + $0x1d8] sm:$0xff]
        %v871 = vld [vmem:[#allocation9 + $0x1e0] sm:$0xff]
        %v872 = vld [vmem:[#allocation9 + $0x1e8] sm:$0xff]
        %v873 = vld [vmem:[#allocation9 + $0x1f0] sm:$0xff]
        %v874 = vld [vmem:[#allocation9 + $0x1f8] sm:$0xff]
        %v875 = vld [vmem:[%s4] sm:$0x1]
        %v877 = vlaneseq
        %v878 = vshrl.u32 %v877, 7
        %v879 = vsub.s32 0, %v878
        %v880 = vrot.slane %v875, %v879
        %882 = vmatprep.subr.mxu0 0.0
        %883 = vmatpush1.msra.mxu0 %v811
        %884 = vmatprep.subr.mxu0 0.0
        %885 = vmatpush1.msra.mxu0 %v812
        %886 = vmatprep.subr.mxu0 0.0
        %887 = vmatpush1.msra.mxu0 %v813
        %888 = vmatprep.subr.mxu0 0.0
        %889 = vmatpush1.msra.mxu0 %v814
        %890 = vmatprep.subr.mxu0 0.0
        %891 = vmatpush1.msra.mxu0 %v815
        %892 = vmatprep.subr.mxu0 0.0
        %893 = vmatpush1.msra.mxu0 %v816
        %894 = vmatprep.subr.mxu0 0.0
        %895 = vmatpush1.msra.mxu0 %v817
        %896 = vmatprep.subr.mxu0 0.0
        %897 = vmatpush1.msra.mxu0 %v818
        %898 = vmatprep.subr.mxu0 0.0
        %899 = vmatpush1.msra.mxu0 %v819
        %900 = vmatprep.subr.mxu0 0.0
        %901 = vmatpush1.msra.mxu0 %v820
        %902 = vmatprep.subr.mxu0 0.0
        %903 = vmatpush1.msra.mxu0 %v821
        %904 = vmatprep.subr.mxu0 0.0
        %905 = vmatpush1.msra.mxu0 %v822
        %906 = vmatprep.subr.mxu0 0.0
        %907 = vmatpush1.msra.mxu0 %v823
        %908 = vmatprep.subr.mxu0 0.0
        %909 = vmatpush1.msra.mxu0 %v824
        %910 = vmatprep.subr.mxu0 0.0
        %911 = vmatpush1.msra.mxu0 %v825
        %912 = vmatprep.subr.mxu0 0.0
        %913 = vmatpush1.msra.mxu0 %v826
        %914 = vmatprep.subr.mxu0 0.0
        %915 = vmatpush1.msra.mxu0 %v827
        %916 = vmatprep.subr.mxu0 0.0
        %917 = vmatpush1.msra.mxu0 %v828
        %918 = vmatprep.subr.mxu0 0.0
        %919 = vmatpush1.msra.mxu0 %v829
        %920 = vmatprep.subr.mxu0 0.0
        %921 = vmatpush1.msra.mxu0 %v830
        %922 = vmatprep.subr.mxu0 0.0
        %923 = vmatpush1.msra.mxu0 %v831
        %924 = vmatprep.subr.mxu0 0.0
        %925 = vmatpush1.msra.mxu0 %v832
        %926 = vmatprep.subr.mxu0 0.0
        %927 = vmatpush1.msra.mxu0 %v833
        %928 = vmatprep.subr.mxu0 0.0
        %929 = vmatpush1.msra.mxu0 %v834
        %930 = vmatprep.subr.mxu0 0.0
        %931 = vmatpush1.msra.mxu0 %v835
        %932 = vmatprep.subr.mxu0 0.0
        %933 = vmatpush1.msra.mxu0 %v836
        %934 = vmatprep.subr.mxu0 0.0
        %935 = vmatpush1.msra.mxu0 %v837
        %936 = vmatprep.subr.mxu0 0.0
        %937 = vmatpush1.msra.mxu0 %v838
        %938 = vmatprep.subr.mxu0 0.0
        %939 = vmatpush1.msra.mxu0 %v839
        %940 = vmatprep.subr.mxu0 0.0
        %941 = vmatpush1.msra.mxu0 %v840
        %942 = vmatprep.subr.mxu0 0.0
        %943 = vmatpush1.msra.mxu0 %v841
        %944 = vmatprep.subr.mxu0 0.0
        %945 = vmatpush1.msra.mxu0 %v842
        %946 = vmatprep.mubr.f32.mxu0 %v371
        %947 = vmatmul.mubr.f32.gmra.mrb[0].mxu0 %v370
        %v948 = vpop.f32.mrb[0].mxu0
        %v949 = vadd.f32 %v880, %v948
        %v950 = vpop.f32.mrb[0].mxu0
        %951 = vmatprep.mubr.f32.mxu0 %v375
        %952 = vmatmul.mubr.f32.gmra.mrb[0].mxu0 %v374
        %v953 = vpop.f32.mrb[0].mxu0
        %v954 = vadd.f32 %v880, %v953
        %v955 = vpop.f32.mrb[0].mxu0
        %956 = vmatprep.mubr.f32.mxu0 %v379
        %957 = vmatmul.mubr.f32.gmra.mrb[0].mxu0 %v378
        %v958 = vpop.f32.mrb[0].mxu0
        %v959 = vadd.f32 %v880, %v958
        %v960 = vpop.f32.mrb[0].mxu0
        %961 = vmatprep.mubr.f32.mxu0 %v383
        %962 = vmatmul.mubr.f32.gmra.mrb[0].mxu0 %v382
        %v963 = vpop.f32.mrb[0].mxu0
        %v964 = vadd.f32 %v880, %v963
        %v965 = vpop.f32.mrb[0].mxu0
        %966 = vmatprep.mubr.f32.mxu0 %v387
        %967 = vmatmul.mubr.f32.gmra.mrb[0].mxu0 %v386
        %v968 = vpop.f32.mrb[0].mxu0
        %v969 = vadd.f32 %v880, %v968
        %v970 = vpop.f32.mrb[0].mxu0
        %971 = vmatprep.mubr.f32.mxu0 %v391
        %972 = vmatmul.mubr.f32.gmra.mrb[0].mxu0 %v390
        %v973 = vpop.f32.mrb[0].mxu0
        %v974 = vadd.f32 %v880, %v973
        %v975 = vpop.f32.mrb[0].mxu0
        %976 = vmatprep.mubr.f32.mxu0 %v395
        %977 = vmatmul.mubr.f32.gmra.mrb[0].mxu0 %v394
        %v978 = vpop.f32.mrb[0].mxu0
        %v979 = vadd.f32 %v880, %v978
        %v980 = vpop.f32.mrb[0].mxu0
        %981 = vmatprep.mubr.f32.mxu0 %v399
        %982 = vmatmul.mubr.f32.gmra.mrb[0].mxu0 %v398
        %v983 = vpop.f32.mrb[0].mxu0
        %v984 = vadd.f32 %v880, %v983
        %v985 = vpop.f32.mrb[0].mxu0
        %986 = vmatprep.mubr.f32.mxu0 %v403
        %987 = vmatmul.mubr.f32.gmra.mrb[0].mxu0 %v402
        %v988 = vpop.f32.mrb[0].mxu0
        %v989 = vadd.f32 %v880, %v988
        %v990 = vpop.f32.mrb[0].mxu0
        %991 = vmatprep.mubr.f32.mxu0 %v407
        %992 = vmatmul.mubr.f32.gmra.mrb[0].mxu0 %v406
        %v993 = vpop.f32.mrb[0].mxu0
        %v994 = vadd.f32 %v880, %v993
        %v995 = vpop.f32.mrb[0].mxu0
        %996 = vmatprep.mubr.f32.mxu0 %v411
        %997 = vmatmul.mubr.f32.gmra.mrb[0].mxu0 %v410
        %v998 = vpop.f32.mrb[0].mxu0
        %v999 = vadd.f32 %v880, %v998
        %v1000 = vpop.f32.mrb[0].mxu0
        %1001 = vmatprep.mubr.f32.mxu0 %v415
        %1002 = vmatmul.mubr.f32.gmra.mrb[0].mxu0 %v414
        %v1003 = vpop.f32.mrb[0].mxu0
        %v1004 = vadd.f32 %v880, %v1003
        %v1005 = vpop.f32.mrb[0].mxu0
        %1006 = vmatprep.mubr.f32.mxu0 %v419
        %1007 = vmatmul.mubr.f32.gmra.mrb[0].mxu0 %v418
        %v1008 = vpop.f32.mrb[0].mxu0
        %v1009 = vadd.f32 %v880, %v1008
        %v1010 = vpop.f32.mrb[0].mxu0
        %1011 = vmatprep.mubr.f32.mxu0 %v423
        %1012 = vmatmul.mubr.f32.gmra.mrb[0].mxu0 %v422
        %v1013 = vpop.f32.mrb[0].mxu0
        %v1014 = vadd.f32 %v880, %v1013
        %v1015 = vpop.f32.mrb[0].mxu0
        %1016 = vmatprep.mubr.f32.mxu0 %v427
        %1017 = vmatmul.mubr.f32.gmra.mrb[0].mxu0 %v426
        %v1018 = vpop.f32.mrb[0].mxu0
        %v1019 = vadd.f32 %v880, %v1018
        %v1020 = vpop.f32.mrb[0].mxu0
        %1021 = vmatprep.mubr.f32.mxu0 %v431
        %1022 = vmatmul.mubr.f32.gmra.mrb[0].mxu0 %v430
        %v1023 = vpop.f32.mrb[0].mxu0
        %v1024 = vadd.f32 %v880, %v1023
        %v1025 = vpop.f32.mrb[0].mxu0
        %1026 = vdwg.mxu0
        %1027 = vmatprep.subr.mxu0 0.0
        %1028 = vmatpush1.msra.mxu0 %v843
        %1029 = vmatprep.subr.mxu0 0.0
        %1030 = vmatpush1.msra.mxu0 %v844
        %1031 = vmatprep.subr.mxu0 0.0
        %1032 = vmatpush1.msra.mxu0 %v845
        %1033 = vmatprep.subr.mxu0 0.0
        %1034 = vmatpush1.msra.mxu0 %v846
        %1035 = vmatprep.subr.mxu0 0.0
        %1036 = vmatpush1.msra.mxu0 %v847
        %1037 = vmatprep.subr.mxu0 0.0
        %1038 = vmatpush1.msra.mxu0 %v848
        %1039 = vmatprep.subr.mxu0 0.0
        %1040 = vmatpush1.msra.mxu0 %v849
        %1041 = vmatprep.subr.mxu0 0.0
        %1042 = vmatpush1.msra.mxu0 %v850
        %1043 = vmatprep.subr.mxu0 0.0
        %1044 = vmatpush1.msra.mxu0 %v851
        %1045 = vmatprep.subr.mxu0 0.0
        %1046 = vmatpush1.msra.mxu0 %v852
        %1047 = vmatprep.subr.mxu0 0.0
        %1048 = vmatpush1.msra.mxu0 %v853
        %1049 = vmatprep.subr.mxu0 0.0
        %1050 = vmatpush1.msra.mxu0 %v854
        %1051 = vmatprep.subr.mxu0 0.0
        %1052 = vmatpush1.msra.mxu0 %v855
        %1053 = vmatprep.subr.mxu0 0.0
        %1054 = vmatpush1.msra.mxu0 %v856
        %1055 = vmatprep.subr.mxu0 0.0
        %1056 = vmatpush1.msra.mxu0 %v857
        %1057 = vmatprep.subr.mxu0 0.0
        %1058 = vmatpush1.msra.mxu0 %v858
        %1059 = vmatprep.subr.mxu0 0.0
        %1060 = vmatpush1.msra.mxu0 %v859
        %1061 = vmatprep.subr.mxu0 0.0
        %1062 = vmatpush1.msra.mxu0 %v860
        %1063 = vmatprep.subr.mxu0 0.0
        %1064 = vmatpush1.msra.mxu0 %v861
        %1065 = vmatprep.subr.mxu0 0.0
        %1066 = vmatpush1.msra.mxu0 %v862
        %1067 = vmatprep.subr.mxu0 0.0
        %1068 = vmatpush1.msra.mxu0 %v863
        %1069 = vmatprep.subr.mxu0 0.0
        %1070 = vmatpush1.msra.mxu0 %v864
        %1071 = vmatprep.subr.mxu0 0.0
        %1072 = vmatpush1.msra.mxu0 %v865
        %1073 = vmatprep.subr.mxu0 0.0
        %1074 = vmatpush1.msra.mxu0 %v866
        %1075 = vmatprep.subr.mxu0 0.0
        %1076 = vmatpush1.msra.mxu0 %v867
        %1077 = vmatprep.subr.mxu0 0.0
        %1078 = vmatpush1.msra.mxu0 %v868
        %1079 = vmatprep.subr.mxu0 0.0
        %1080 = vmatpush1.msra.mxu0 %v869
        %1081 = vmatprep.subr.mxu0 0.0
        %1082 = vmatpush1.msra.mxu0 %v870
        %1083 = vmatprep.subr.mxu0 0.0
        %1084 = vmatpush1.msra.mxu0 %v871
        %1085 = vmatprep.subr.mxu0 0.0
        %1086 = vmatpush1.msra.mxu0 %v872
        %1087 = vmatprep.subr.mxu0 0.0
        %1088 = vmatpush1.msra.mxu0 %v873
        %1089 = vmatprep.subr.mxu0 0.0
        %1090 = vmatpush1.msra.mxu0 %v874
        %1091 = vmatprep.mubr.f32.mxu0 %v373
        %1092 = vmatmul.mubr.f32.gmra.mrb[0].mxu0 %v372
        %v1093 = vpop.f32.mrb[0].mxu0
        %v1094 = vadd.f32 %v949, %v1093
        %v1095 = vpop.f32.mrb[0].mxu0
        %1096 = vmatprep.mubr.f32.mxu0 %v377
        %1097 = vmatmul.mubr.f32.gmra.mrb[0].mxu0 %v376
        %v1098 = vpop.f32.mrb[0].mxu0
        %v1099 = vadd.f32 %v954, %v1098
        %v1100 = vpop.f32.mrb[0].mxu0
        %1101 = vmatprep.mubr.f32.mxu0 %v381
        %1102 = vmatmul.mubr.f32.gmra.mrb[0].mxu0 %v380
        %v1103 = vpop.f32.mrb[0].mxu0
        %v1104 = vadd.f32 %v959, %v1103
        %v1105 = vpop.f32.mrb[0].mxu0
        %1106 = vmatprep.mubr.f32.mxu0 %v385
        %1107 = vmatmul.mubr.f32.gmra.mrb[0].mxu0 %v384
        %v1108 = vpop.f32.mrb[0].mxu0
        %v1109 = vadd.f32 %v964, %v1108
        %v1110 = vpop.f32.mrb[0].mxu0
        %1111 = vmatprep.mubr.f32.mxu0 %v389
        %1112 = vmatmul.mubr.f32.gmra.mrb[0].mxu0 %v388
        %v1113 = vpop.f32.mrb[0].mxu0
        %v1114 = vadd.f32 %v969, %v1113
        %v1115 = vpop.f32.mrb[0].mxu0
        %1116 = vmatprep.mubr.f32.mxu0 %v393
        %1117 = vmatmul.mubr.f32.gmra.mrb[0].mxu0 %v392
        %v1118 = vpop.f32.mrb[0].mxu0
        %v1119 = vadd.f32 %v974, %v1118
        %v1120 = vpop.f32.mrb[0].mxu0
        %1121 = vmatprep.mubr.f32.mxu0 %v397
        %1122 = vmatmul.mubr.f32.gmra.mrb[0].mxu0 %v396
        %v1123 = vpop.f32.mrb[0].mxu0
        %v1124 = vadd.f32 %v979, %v1123
        %v1125 = vpop.f32.mrb[0].mxu0
        %1126 = vmatprep.mubr.f32.mxu0 %v401
        %1127 = vmatmul.mubr.f32.gmra.mrb[0].mxu0 %v400
        %v1128 = vpop.f32.mrb[0].mxu0
        %v1129 = vadd.f32 %v984, %v1128
        %v1130 = vpop.f32.mrb[0].mxu0
        %1131 = vmatprep.mubr.f32.mxu0 %v405
        %1132 = vmatmul.mubr.f32.gmra.mrb[0].mxu0 %v404
        %v1133 = vpop.f32.mrb[0].mxu0
        %v1134 = vadd.f32 %v989, %v1133
        %v1135 = vpop.f32.mrb[0].mxu0
        %1136 = vmatprep.mubr.f32.mxu0 %v409
        %1137 = vmatmul.mubr.f32.gmra.mrb[0].mxu0 %v408
        %v1138 = vpop.f32.mrb[0].mxu0
        %v1139 = vadd.f32 %v994, %v1138
        %v1140 = vpop.f32.mrb[0].mxu0
        %1141 = vmatprep.mubr.f32.mxu0 %v413
        %1142 = vmatmul.mubr.f32.gmra.mrb[0].mxu0 %v412
        %v1143 = vpop.f32.mrb[0].mxu0
        %v1144 = vadd.f32 %v999, %v1143
        %v1145 = vpop.f32.mrb[0].mxu0
        %1146 = vmatprep.mubr.f32.mxu0 %v417
        %1147 = vmatmul.mubr.f32.gmra.mrb[0].mxu0 %v416
        %v1148 = vpop.f32.mrb[0].mxu0
        %v1149 = vadd.f32 %v1004, %v1148
        %v1150 = vpop.f32.mrb[0].mxu0
        %1151 = vmatprep.mubr.f32.mxu0 %v421
        %1152 = vmatmul.mubr.f32.gmra.mrb[0].mxu0 %v420
        %v1153 = vpop.f32.mrb[0].mxu0
        %v1154 = vadd.f32 %v1009, %v1153
        %v1155 = vpop.f32.mrb[0].mxu0
        %1156 = vmatprep.mubr.f32.mxu0 %v425
        %1157 = vmatmul.mubr.f32.gmra.mrb[0].mxu0 %v424
        %v1158 = vpop.f32.mrb[0].mxu0
        %v1159 = vadd.f32 %v1014, %v1158
        %v1160 = vpop.f32.mrb[0].mxu0
        %1161 = vmatprep.mubr.f32.mxu0 %v429
        %1162 = vmatmul.mubr.f32.gmra.mrb[0].mxu0 %v428
        %v1163 = vpop.f32.mrb[0].mxu0
        %v1164 = vadd.f32 %v1019, %v1163
        %v1165 = vpop.f32.mrb[0].mxu0
        %1166 = vmatprep.mubr.f32.mxu0 %v433
        %1167 = vmatmul.mubr.f32.gmra.mrb[0].mxu0 %v432
        %v1168 = vpop.f32.mrb[0].mxu0
        %v1169 = vadd.f32 %v1024, %v1168
        %v1170 = vpop.f32.mrb[0].mxu0
        %1171 = vdwg.mxu0
        %v1172 = vxor.u32 %v1094, 2147483648
        %v1173 = vxor.u32 %v1099, 2147483648
        %v1174 = vxor.u32 %v1104, 2147483648
        %v1175 = vxor.u32 %v1109, 2147483648
        %v1176 = vxor.u32 %v1114, 2147483648
        %v1177 = vxor.u32 %v1119, 2147483648
        %v1178 = vxor.u32 %v1124, 2147483648
        %v1179 = vxor.u32 %v1129, 2147483648
        %v1180 = vxor.u32 %v1134, 2147483648
        %v1181 = vxor.u32 %v1139, 2147483648
        %v1182 = vxor.u32 %v1144, 2147483648
        %v1183 = vxor.u32 %v1149, 2147483648
        %v1184 = vxor.u32 %v1154, 2147483648
        %v1185 = vxor.u32 %v1159, 2147483648
        %v1186 = vxor.u32 %v1164, 2147483648
        %v1187 = vxor.u32 %v1169, 2147483648
        %v1188 = vmul.f32 %v1172, 1.442695
        %v1189 = vpow.pop %v1188
        %v1190 = vmul.f32 %v1173, 1.442695
        %v1191 = vpow.pop %v1190
        %v1192 = vmul.f32 %v1174, 1.442695
        %v1193 = vpow.pop %v1192
        %v1194 = vmul.f32 %v1175, 1.442695
        %v1195 = vpow.pop %v1194
        %v1196 = vmul.f32 %v1176, 1.442695
        %v1197 = vpow.pop %v1196
        %v1198 = vmul.f32 %v1177, 1.442695
        %v1199 = vpow.pop %v1198
        %v1200 = vmul.f32 %v1178, 1.442695
        %v1201 = vpow.pop %v1200
        %v1202 = vmul.f32 %v1179, 1.442695
        %v1203 = vpow.pop %v1202
        %v1204 = vmul.f32 %v1180, 1.442695
        %v1205 = vpow.pop %v1204
        %v1206 = vmul.f32 %v1181, 1.442695
        %v1207 = vpow.pop %v1206
        %v1208 = vmul.f32 %v1182, 1.442695
        %v1209 = vpow.pop %v1208
        %v1210 = vmul.f32 %v1183, 1.442695
        %v1211 = vpow.pop %v1210
        %v1212 = vmul.f32 %v1184, 1.442695
        %v1213 = vpow.pop %v1212
        %v1214 = vmul.f32 %v1185, 1.442695
        %v1215 = vpow.pop %v1214
        %v1216 = vmul.f32 %v1186, 1.442695
        %v1217 = vpow.pop %v1216
        %v1218 = vmul.f32 %v1187, 1.442695
        %v1219 = vpow.pop %v1218
        %v1220 = vadd.f32 %v1189, 1.0
        %v1221 = vadd.f32 %v1191, 1.0
        %v1222 = vadd.f32 %v1193, 1.0
        %v1223 = vadd.f32 %v1195, 1.0
        %v1224 = vadd.f32 %v1197, 1.0
        %v1225 = vadd.f32 %v1199, 1.0
        %v1226 = vadd.f32 %v1201, 1.0
        %v1227 = vadd.f32 %v1203, 1.0
        %v1228 = vadd.f32 %v1205, 1.0
        %v1229 = vadd.f32 %v1207, 1.0
        %v1230 = vadd.f32 %v1209, 1.0
        %v1231 = vadd.f32 %v1211, 1.0
        %v1232 = vadd.f32 %v1213, 1.0
        %v1233 = vadd.f32 %v1215, 1.0
        %v1234 = vadd.f32 %v1217, 1.0
        %v1235 = vadd.f32 %v1219, 1.0
        %v1236 = vrcp.pop %v1220
        %v1237 = vmul.f32 1.0, %v1236
        %v1238 = vrcp.pop %v1221
        %v1239 = vmul.f32 1.0, %v1238
        %v1240 = vrcp.pop %v1222
        %v1241 = vmul.f32 1.0, %v1240
        %v1242 = vrcp.pop %v1223
        %v1243 = vmul.f32 1.0, %v1242
        %v1244 = vrcp.pop %v1224
        %v1245 = vmul.f32 1.0, %v1244
        %v1246 = vrcp.pop %v1225
        %v1247 = vmul.f32 1.0, %v1246
        %v1248 = vrcp.pop %v1226
        %v1249 = vmul.f32 1.0, %v1248
        %v1250 = vrcp.pop %v1227
        %v1251 = vmul.f32 1.0, %v1250
        %v1252 = vrcp.pop %v1228
        %v1253 = vmul.f32 1.0, %v1252
        %v1254 = vrcp.pop %v1229
        %v1255 = vmul.f32 1.0, %v1254
        %v1256 = vrcp.pop %v1230
        %v1257 = vmul.f32 1.0, %v1256
        %v1258 = vrcp.pop %v1231
        %v1259 = vmul.f32 1.0, %v1258
        %v1260 = vrcp.pop %v1232
        %v1261 = vmul.f32 1.0, %v1260
        %v1262 = vrcp.pop %v1233
        %v1263 = vmul.f32 1.0, %v1262
        %v1264 = vrcp.pop %v1234
        %v1265 = vmul.f32 1.0, %v1264
        %v1266 = vrcp.pop %v1235
        %v1267 = vmul.f32 1.0, %v1266
        %v1268 = vmul.f32 %v795, %v1237
        %v1269 = vmul.f32 %v796, %v1239
        %v1270 = vmul.f32 %v797, %v1241
        %v1271 = vmul.f32 %v798, %v1243
        %v1272 = vmul.f32 %v799, %v1245
        %v1273 = vmul.f32 %v800, %v1247
        %v1274 = vmul.f32 %v801, %v1249
        %v1275 = vmul.f32 %v802, %v1251
        %v1276 = vmul.f32 %v803, %v1253
        %v1277 = vmul.f32 %v804, %v1255
        %v1278 = vmul.f32 %v805, %v1257
        %v1279 = vmul.f32 %v806, %v1259
        %v1280 = vmul.f32 %v807, %v1261
        %v1281 = vmul.f32 %v808, %v1263
        %v1282 = vmul.f32 %v809, %v1265
        %v1283 = vmul.f32 %v810, %v1267
        %v1284 = vld [vmem:[%s5] sm:$0x1]
        %v1285 = vld [vmem:[#allocation5] sm:$0x1]
        %1287 = vset.pattern.permute.xlu0 0
        %1288 = vperm.xlu0 %1287, %v1285
        %v1289 = vpop.permute.xlu0 %1288
        %v1291 = vlaneseq
        %v1292 = vshrl.u32 %v1291, 7
        %v1293 = vsub.s32 0, %v1292
        %v1294 = vrot.slane %v1289, %v1293
        %1295 = vmatprep.subr.mxu0 0.0
        %1296 = vmatpush1.xpose.msra.mxu0 %v1268
        %1297 = vmatprep.subr.mxu0 0.0
        %1298 = vmatpush1.xpose.msra.mxu0 %v1269
        %1299 = vmatprep.subr.mxu0 0.0
        %1300 = vmatpush1.xpose.msra.mxu0 %v1270
        %1301 = vmatprep.subr.mxu0 0.0
        %1302 = vmatpush1.xpose.msra.mxu0 %v1271
        %1303 = vmatprep.subr.mxu0 0.0
        %1304 = vmatpush1.xpose.msra.mxu0 %v1272
        %1305 = vmatprep.subr.mxu0 0.0
        %1306 = vmatpush1.xpose.msra.mxu0 %v1273
        %1307 = vmatprep.subr.mxu0 0.0
        %1308 = vmatpush1.xpose.msra.mxu0 %v1274
        %1309 = vmatprep.subr.mxu0 0.0
        %1310 = vmatpush1.xpose.msra.mxu0 %v1275
        %1311 = vmatprep.subr.mxu0 0.0
        %1312 = vmatpush1.xpose.msra.mxu0 %v1276
        %1313 = vmatprep.subr.mxu0 0.0
        %1314 = vmatpush1.xpose.msra.mxu0 %v1277
        %1315 = vmatprep.subr.mxu0 0.0
        %1316 = vmatpush1.xpose.msra.mxu0 %v1278
        %1317 = vmatprep.subr.mxu0 0.0
        %1318 = vmatpush1.xpose.msra.mxu0 %v1279
        %1319 = vmatprep.subr.mxu0 0.0
        %1320 = vmatpush1.xpose.msra.mxu0 %v1280
        %1321 = vmatprep.subr.mxu0 0.0
        %1322 = vmatpush1.xpose.msra.mxu0 %v1281
        %1323 = vmatprep.subr.mxu0 0.0
        %1324 = vmatpush1.xpose.msra.mxu0 %v1282
        %1325 = vmatprep.subr.mxu0 0.0
        %1326 = vmatpush1.xpose.msra.mxu0 %v1283
        %1327 = vmatprep.subr.mxu0 0.0
        %1328 = vmatpush1.xpose.msra.mxu0 0.0
        %1329 = vmatprep.subr.mxu0 0.0
        %1330 = vmatpush1.xpose.msra.mxu0 0.0
        %1331 = vmatprep.subr.mxu0 0.0
        %1332 = vmatpush1.xpose.msra.mxu0 0.0
        %1333 = vmatprep.subr.mxu0 0.0
        %1334 = vmatpush1.xpose.msra.mxu0 0.0
        %1335 = vmatprep.subr.mxu0 0.0
        %1336 = vmatpush1.xpose.msra.mxu0 0.0
        %1337 = vmatprep.subr.mxu0 0.0
        %1338 = vmatpush1.xpose.msra.mxu0 0.0
        %1339 = vmatprep.subr.mxu0 0.0
        %1340 = vmatpush1.xpose.msra.mxu0 0.0
        %1341 = vmatprep.subr.mxu0 0.0
        %1342 = vmatpush1.xpose.msra.mxu0 0.0
        %1343 = vmatprep.subr.mxu0 0.0
        %1344 = vmatpush1.xpose.msra.mxu0 0.0
        %1345 = vmatprep.subr.mxu0 0.0
        %1346 = vmatpush1.xpose.msra.mxu0 0.0
        %1347 = vmatprep.subr.mxu0 0.0
        %1348 = vmatpush1.xpose.msra.mxu0 0.0
        %1349 = vmatprep.subr.mxu0 0.0
        %1350 = vmatpush1.xpose.msra.mxu0 0.0
        %1351 = vmatprep.subr.mxu0 0.0
        %1352 = vmatpush1.xpose.msra.mxu0 0.0
        %1353 = vmatprep.subr.mxu0 0.0
        %1354 = vmatpush1.xpose.msra.mxu0 0.0
        %1355 = vmatprep.subr.mxu0 0.0
        %1356 = vmatpush1.xpose.msra.mxu0 0.0
        %1357 = vmatprep.subr.mxu0 0.0
        %1358 = vmatpush1.xpose.msra.mxu0 0.0
        %1359 = vmatprep.mubr.f32.mxu0 0.0
        %1360 = vmatmul.mubr.f32.gmra.mrb[0].mxu0 %v1284
        %v1361 = vpop.f32.mrb[0].mxu0
        %v1362 = vadd.f32 %v1294, %v1361
        %v1363 = vpop.f32.mrb[0].mxu0
        %1364 = vdwg.mxu0
        %v1365 = vlaneseq
        %v1366 = vand.u32 %v1365, 127
        %s1367 = smul.u32 %s27, 128
        %v1368 = vstv %s1367
        %v1369 = vadd.s32 %v1368, %v1366
        %vm1370 = vcmp.lt.s32.totalorder %v1369, 300
        %v1371 = vsel %vm1370, %v1362, -1e+30
        %v1372 = vld [vmem:[#allocation2] sm:$0x1]
        %vm1373 = vcmask 1040384
        %v1374 = vsel %vm1373, %v1371, -inf
        %1375 = vmax.xlane.f32.xlu0 %v1374
        %v1376 = vpop.xlane.xlu0 %1375
        %v1377 = vmax.f32 %v1372, %v1376
        %v1378 = vsub.f32 %v1372, %v1377
        %v1379 = vmul.f32 %v1378, 1.442695
        %v1380 = vpow.pop %v1379
        %1382 = vset.pattern.permute.xlu0 0
        %1383 = vperm.xlu0 %1382, %v1377
        %v1384 = vpop.permute.xlu0 %1383
        %v1386 = vlaneseq
        %v1387 = vshrl.u32 %v1386, 7
        %v1388 = vsub.s32 0, %v1387
        %v1389 = vrot.slane %v1384, %v1388
        %v1390 = vsub.f32 %v1371, %v1389
        %v1391 = vmul.f32 %v1390, 1.442695
        %v1392 = vpow.pop %v1391
        %v1393 = vld [vmem:[#allocation3] sm:$0x1]
        %v1394 = vmul.f32 %v1380, %v1393
        %v1395 = vsel %vm1373, %v1392, 0.0
        %1396 = vadd.xlane.f32.xlu0 %v1395
        %v1397 = vpop.xlane.xlu0 %1396
        %v1398 = vadd.f32 %v1394, %v1397
        %vm1399 = vcmask 0
        %1400 = vst.msk [vmem:[#allocation3] sm:$0x1] %vm1399, %v1398
        %v1401 = vld [vmem:[#allocation4] sm:$0xf]
        %1403 = vset.pattern.permute.xlu0 0
        %1404 = vperm.xlu0 %1403, %v1380
        %v1405 = vpop.permute.xlu0 %1404
        %v1407 = vlaneseq
        %v1408 = vshrl.u32 %v1407, 7
        %v1409 = vsub.s32 0, %v1408
        %v1410 = vrot.slane %v1405, %v1409
        %v1411 = vmul.f32 %v1410, %v1401
        %1412 = vmatprep.subr.mxu0 %v371
        %1413 = vmatpush1.msra.mxu0 %v370
        %1414 = vmatprep.subr.mxu0 %v375
        %1415 = vmatpush1.msra.mxu0 %v374
        %1416 = vmatprep.subr.mxu0 %v379
        %1417 = vmatpush1.msra.mxu0 %v378
        %1418 = vmatprep.subr.mxu0 %v383
        %1419 = vmatpush1.msra.mxu0 %v382
        %1420 = vmatprep.subr.mxu0 %v387
        %1421 = vmatpush1.msra.mxu0 %v386
        %1422 = vmatprep.subr.mxu0 %v391
        %1423 = vmatpush1.msra.mxu0 %v390
        %1424 = vmatprep.subr.mxu0 %v395
        %1425 = vmatpush1.msra.mxu0 %v394
        %1426 = vmatprep.subr.mxu0 %v399
        %1427 = vmatpush1.msra.mxu0 %v398
        %1428 = vmatprep.subr.mxu0 %v403
        %1429 = vmatpush1.msra.mxu0 %v402
        %1430 = vmatprep.subr.mxu0 %v407
        %1431 = vmatpush1.msra.mxu0 %v406
        %1432 = vmatprep.subr.mxu0 %v411
        %1433 = vmatpush1.msra.mxu0 %v410
        %1434 = vmatprep.subr.mxu0 %v415
        %1435 = vmatpush1.msra.mxu0 %v414
        %1436 = vmatprep.subr.mxu0 %v419
        %1437 = vmatpush1.msra.mxu0 %v418
        %1438 = vmatprep.subr.mxu0 %v423
        %1439 = vmatpush1.msra.mxu0 %v422
        %1440 = vmatprep.subr.mxu0 %v427
        %1441 = vmatpush1.msra.mxu0 %v426
        %1442 = vmatprep.subr.mxu0 %v431
        %1443 = vmatpush1.msra.mxu0 %v430
        %1444 = vmatprep.subr.mxu0 0.0
        %1445 = vmatpush1.msra.mxu0 0.0
        %1446 = vmatprep.subr.mxu0 0.0
        %1447 = vmatpush1.msra.mxu0 0.0
        %1448 = vmatprep.subr.mxu0 0.0
        %1449 = vmatpush1.msra.mxu0 0.0
        %1450 = vmatprep.subr.mxu0 0.0
        %1451 = vmatpush1.msra.mxu0 0.0
        %1452 = vmatprep.subr.mxu0 0.0
        %1453 = vmatpush1.msra.mxu0 0.0
        %1454 = vmatprep.subr.mxu0 0.0
        %1455 = vmatpush1.msra.mxu0 0.0
        %1456 = vmatprep.subr.mxu0 0.0
        %1457 = vmatpush1.msra.mxu0 0.0
        %1458 = vmatprep.subr.mxu0 0.0
        %1459 = vmatpush1.msra.mxu0 0.0
        %1460 = vmatprep.subr.mxu0 0.0
        %1461 = vmatpush1.msra.mxu0 0.0
        %1462 = vmatprep.subr.mxu0 0.0
        %1463 = vmatpush1.msra.mxu0 0.0
        %1464 = vmatprep.subr.mxu0 0.0
        %1465 = vmatpush1.msra.mxu0 0.0
        %1466 = vmatprep.subr.mxu0 0.0
        %1467 = vmatpush1.msra.mxu0 0.0
        %1468 = vmatprep.subr.mxu0 0.0
        %1469 = vmatpush1.msra.mxu0 0.0
        %1470 = vmatprep.subr.mxu0 0.0
        %1471 = vmatpush1.msra.mxu0 0.0
        %1472 = vmatprep.subr.mxu0 0.0
        %1473 = vmatpush1.msra.mxu0 0.0
        %1474 = vmatprep.subr.mxu0 0.0
        %1475 = vmatpush1.msra.mxu0 0.0
        %1476 = vmatprep.mubr.f32.mxu0 0.0
        %1477 = vmatmul.mubr.f32.gmra.mrb[0].mxu0 %v1392
        %v1478 = vpop.f32.mrb[0].mxu0
        %v1479 = vadd.f32 0.0, %v1478
        %v1480 = vpop.f32.mrb[0].mxu0
        %v1481 = vadd.f32 0.0, %v1480
        %1482 = vdwg.mxu0
        %1483 = vmatprep.subr.mxu0 %v373
        %1484 = vmatpush1.msra.mxu0 %v372
        %1485 = vmatprep.subr.mxu0 %v377
        %1486 = vmatpush1.msra.mxu0 %v376
        %1487 = vmatprep.subr.mxu0 %v381
        %1488 = vmatpush1.msra.mxu0 %v380
        %1489 = vmatprep.subr.mxu0 %v385
        %1490 = vmatpush1.msra.mxu0 %v384
        %1491 = vmatprep.subr.mxu0 %v389
        %1492 = vmatpush1.msra.mxu0 %v388
        %1493 = vmatprep.subr.mxu0 %v393
        %1494 = vmatpush1.msra.mxu0 %v392
        %1495 = vmatprep.subr.mxu0 %v397
        %1496 = vmatpush1.msra.mxu0 %v396
        %1497 = vmatprep.subr.mxu0 %v401
        %1498 = vmatpush1.msra.mxu0 %v400
        %1499 = vmatprep.subr.mxu0 %v405
        %1500 = vmatpush1.msra.mxu0 %v404
        %1501 = vmatprep.subr.mxu0 %v409
        %1502 = vmatpush1.msra.mxu0 %v408
        %1503 = vmatprep.subr.mxu0 %v413
        %1504 = vmatpush1.msra.mxu0 %v412
        %1505 = vmatprep.subr.mxu0 %v417
        %1506 = vmatpush1.msra.mxu0 %v416
        %1507 = vmatprep.subr.mxu0 %v421
        %1508 = vmatpush1.msra.mxu0 %v420
        %1509 = vmatprep.subr.mxu0 %v425
        %1510 = vmatpush1.msra.mxu0 %v424
        %1511 = vmatprep.subr.mxu0 %v429
        %1512 = vmatpush1.msra.mxu0 %v428
        %1513 = vmatprep.subr.mxu0 %v433
        %1514 = vmatpush1.msra.mxu0 %v432
        %1515 = vmatprep.subr.mxu0 0.0
        %1516 = vmatpush1.msra.mxu0 0.0
        %1517 = vmatprep.subr.mxu0 0.0
        %1518 = vmatpush1.msra.mxu0 0.0
        %1519 = vmatprep.subr.mxu0 0.0
        %1520 = vmatpush1.msra.mxu0 0.0
        %1521 = vmatprep.subr.mxu0 0.0
        %1522 = vmatpush1.msra.mxu0 0.0
        %1523 = vmatprep.subr.mxu0 0.0
        %1524 = vmatpush1.msra.mxu0 0.0
        %1525 = vmatprep.subr.mxu0 0.0
        %1526 = vmatpush1.msra.mxu0 0.0
        %1527 = vmatprep.subr.mxu0 0.0
        %1528 = vmatpush1.msra.mxu0 0.0
        %1529 = vmatprep.subr.mxu0 0.0
        %1530 = vmatpush1.msra.mxu0 0.0
        %1531 = vmatprep.subr.mxu0 0.0
        %1532 = vmatpush1.msra.mxu0 0.0
        %1533 = vmatprep.subr.mxu0 0.0
        %1534 = vmatpush1.msra.mxu0 0.0
        %1535 = vmatprep.subr.mxu0 0.0
        %1536 = vmatpush1.msra.mxu0 0.0
        %1537 = vmatprep.subr.mxu0 0.0
        %1538 = vmatpush1.msra.mxu0 0.0
        %1539 = vmatprep.subr.mxu0 0.0
        %1540 = vmatpush1.msra.mxu0 0.0
        %1541 = vmatprep.subr.mxu0 0.0
        %1542 = vmatpush1.msra.mxu0 0.0
        %1543 = vmatprep.subr.mxu0 0.0
        %1544 = vmatpush1.msra.mxu0 0.0
        %1545 = vmatprep.subr.mxu0 0.0
        %1546 = vmatpush1.msra.mxu0 0.0
        %1547 = vmatprep.mubr.f32.mxu0 0.0
        %1548 = vmatmul.mubr.f32.gmra.mrb[0].mxu0 %v1392
        %v1549 = vpop.f32.mrb[0].mxu0
        %v1550 = vadd.f32 0.0, %v1549
        %v1551 = vpop.f32.mrb[0].mxu0
        %v1552 = vadd.f32 0.0, %v1551
        %1553 = vdwg.mxu0
        %v1558 = vcombine.low %v1479, %v1481
        %v1559 = vcombine.low %v1550, %v1552
        %v1561 = vunpack.c.l.s4 1966171168
        %v1562 = vunpack.c.0.s8 %v1561
        %v1563 = vlaneseq
        %v1564 = vshrl.u32 %v1563, 7
        %v1565 = vsub.s32 %v1562, %v1564
        %v1566 = vrot.slane %v1558, %v1565
        %v1568 = vunpack.c.l.s4 1966171168
        %v1569 = vunpack.c.0.s8 %v1568
        %v1570 = vlaneseq
        %v1571 = vshrl.u32 %v1570, 7
        %v1572 = vsub.s32 %v1569, %v1571
        %v1573 = vrot.slane %v1559, %v1572
        %v1574 = vcombine.low %v1566, %v1573
        %v1576 = vunpack.c.l.s4 1966171168
        %v1577 = vunpack.c.0.s8 %v1576
        %v1578 = vlaneseq
        %v1579 = vshrl.u32 %v1578, 7
        %v1580 = vsub.s32 %v1577, %v1579
        %v1581 = vrot.slane %v1574, %v1580
        %v1583 = vadd.f32 %v1411, %v1581
        %v1584 = vlaneseq
        %vm1585 = vcmp.ge.s32.totalorder %v1584, 0
        %vm1586 = vcmp.lt.s32.totalorder %v1584, 512
        %vm1587 = vmand %vm1585, %vm1586
        %1588 = vst.msk [vmem:[#allocation4] sm:$0xf] %vm1587, %v1583
        %1589 = vst.msk [vmem:[#allocation2] sm:$0x1] %vm1399, %v1377
        %p1590 = scmp.eq.s32.totalorder %s27, 2
        // Predicated region
        $region69: #{tpu_custom_call.1} parent=55 // pred_check
          %p1591 = pneg %p1590
        $region70: #{tpu_custom_call.1} parent=55 // pred_check_branch
          %1593 = sbr.rel (%p1591) target = $region72
        $region71: #{tpu_custom_call.1} parent=55 // pred_region
          %v1594 = vld [vmem:[#allocation3] sm:$0x1]
          %v1595 = vrcp.pop %v1594
          %v1596 = vld [vmem:[#allocation4] sm:$0xf]
          %1598 = vset.pattern.permute.xlu0 0
          %1599 = vperm.xlu0 %1598, %v1595
          %v1600 = vpop.permute.xlu0 %1599
          %v1602 = vlaneseq
          %v1603 = vshrl.u32 %v1602, 7
          %v1604 = vsub.s32 0, %v1603
          %v1605 = vrot.slane %v1600, %v1604
          %v1606 = vmul.f32 %v1596, %v1605
          %v1607 = vld [vmem:[%s7] sm:$0xff]
          %v1608 = vld [vmem:[%s7 + $0x8] sm:$0xff]
          %v1609 = vld [vmem:[%s7 + $0x10] sm:$0xff]
          %v1610 = vld [vmem:[%s7 + $0x18] sm:$0xff]
          %v1611 = vld [vmem:[%s7 + $0x20] sm:$0xff]
          %v1612 = vld [vmem:[%s7 + $0x28] sm:$0xff]
          %v1613 = vld [vmem:[%s7 + $0x30] sm:$0xff]
          %v1614 = vld [vmem:[%s7 + $0x38] sm:$0xff]
          %v1615 = vld [vmem:[%s7 + $0x40] sm:$0xff]
          %v1616 = vld [vmem:[%s7 + $0x48] sm:$0xff]
          %v1617 = vld [vmem:[%s7 + $0x50] sm:$0xff]
          %v1618 = vld [vmem:[%s7 + $0x58] sm:$0xff]
          %v1619 = vld [vmem:[%s7 + $0x60] sm:$0xff]
          %v1620 = vld [vmem:[%s7 + $0x68] sm:$0xff]
          %v1621 = vld [vmem:[%s7 + $0x70] sm:$0xff]
          %v1622 = vld [vmem:[%s7 + $0x78] sm:$0xff]
          %v1623 = vld [vmem:[%s7 + $0x80] sm:$0xff]
          %v1624 = vld [vmem:[%s7 + $0x88] sm:$0xff]
          %v1625 = vld [vmem:[%s7 + $0x90] sm:$0xff]
          %v1626 = vld [vmem:[%s7 + $0x98] sm:$0xff]
          %v1627 = vld [vmem:[%s7 + $0xa0] sm:$0xff]
          %v1628 = vld [vmem:[%s7 + $0xa8] sm:$0xff]
          %v1629 = vld [vmem:[%s7 + $0xb0] sm:$0xff]
          %v1630 = vld [vmem:[%s7 + $0xb8] sm:$0xff]
          %v1631 = vld [vmem:[%s7 + $0xc0] sm:$0xff]
          %v1632 = vld [vmem:[%s7 + $0xc8] sm:$0xff]
          %v1633 = vld [vmem:[%s7 + $0xd0] sm:$0xff]
          %v1634 = vld [vmem:[%s7 + $0xd8] sm:$0xff]
          %v1635 = vld [vmem:[%s7 + $0xe0] sm:$0xff]
          %v1636 = vld [vmem:[%s7 + $0xe8] sm:$0xff]
          %v1637 = vld [vmem:[%s7 + $0xf0] sm:$0xff]
          %v1638 = vld [vmem:[%s7 + $0xf8] sm:$0xff]
          %v1639 = vld [vmem:[%s7 + $0x100] sm:$0xff]
          %v1640 = vld [vmem:[%s7 + $0x108] sm:$0xff]
          %v1641 = vld [vmem:[%s7 + $0x110] sm:$0xff]
          %v1642 = vld [vmem:[%s7 + $0x118] sm:$0xff]
          %v1643 = vld [vmem:[%s7 + $0x120] sm:$0xff]
          %v1644 = vld [vmem:[%s7 + $0x128] sm:$0xff]
          %v1645 = vld [vmem:[%s7 + $0x130] sm:$0xff]
          %v1646 = vld [vmem:[%s7 + $0x138] sm:$0xff]
          %v1647 = vld [vmem:[%s7 + $0x140] sm:$0xff]
          %v1648 = vld [vmem:[%s7 + $0x148] sm:$0xff]
          %v1649 = vld [vmem:[%s7 + $0x150] sm:$0xff]
          %v1650 = vld [vmem:[%s7 + $0x158] sm:$0xff]
          %v1651 = vld [vmem:[%s7 + $0x160] sm:$0xff]
          %v1652 = vld [vmem:[%s7 + $0x168] sm:$0xff]
          %v1653 = vld [vmem:[%s7 + $0x170] sm:$0xff]
          %v1654 = vld [vmem:[%s7 + $0x178] sm:$0xff]
          %v1655 = vld [vmem:[%s7 + $0x180] sm:$0xff]
          %v1656 = vld [vmem:[%s7 + $0x188] sm:$0xff]
          %v1657 = vld [vmem:[%s7 + $0x190] sm:$0xff]
          %v1658 = vld [vmem:[%s7 + $0x198] sm:$0xff]
          %v1659 = vld [vmem:[%s7 + $0x1a0] sm:$0xff]
          %v1660 = vld [vmem:[%s7 + $0x1a8] sm:$0xff]
          %v1661 = vld [vmem:[%s7 + $0x1b0] sm:$0xff]
          %v1662 = vld [vmem:[%s7 + $0x1b8] sm:$0xff]
          %v1663 = vld [vmem:[%s7 + $0x1c0] sm:$0xff]
          %v1664 = vld [vmem:[%s7 + $0x1c8] sm:$0xff]
          %v1665 = vld [vmem:[%s7 + $0x1d0] sm:$0xff]
          %v1666 = vld [vmem:[%s7 + $0x1d8] sm:$0xff]
          %v1667 = vld [vmem:[%s7 + $0x1e0] sm:$0xff]
          %v1668 = vld [vmem:[%s7 + $0x1e8] sm:$0xff]
          %v1669 = vld [vmem:[%s7 + $0x1f0] sm:$0xff]
          %v1670 = vld [vmem:[%s7 + $0x1f8] sm:$0xff]
          %v1671 = vld [vmem:[%s8] sm:$0x1]
          %v1673 = vlaneseq
          %v1674 = vshrl.u32 %v1673, 7
          %v1675 = vsub.s32 0, %v1674
          %v1676 = vrot.slane %v1606, %v1675
          %v1677 = vlaneseq
          %v1678 = vshrl.u32 %v1677, 7
          %v1679 = vsub.s32 1, %v1678
          %v1680 = vrot.slane %v1606, %v1679
          %v1681 = vlaneseq
          %v1682 = vshrl.u32 %v1681, 7
          %v1683 = vsub.s32 2, %v1682
          %v1684 = vrot.slane %v1606, %v1683
          %v1685 = vlaneseq
          %v1686 = vshrl.u32 %v1685, 7
          %v1687 = vsub.s32 3, %v1686
          %v1688 = vrot.slane %v1606, %v1687
          %1693 = vmatprep.subr.mxu0 0.0
          %1694 = vmatpush1.msra.mxu0 %v1607
          %1695 = vmatprep.subr.mxu0 0.0
          %1696 = vmatpush1.msra.mxu0 %v1608
          %1697 = vmatprep.subr.mxu0 0.0
          %1698 = vmatpush1.msra.mxu0 %v1609
          %1699 = vmatprep.subr.mxu0 0.0
          %1700 = vmatpush1.msra.mxu0 %v1610
          %1701 = vmatprep.subr.mxu0 0.0
          %1702 = vmatpush1.msra.mxu0 %v1611
          %1703 = vmatprep.subr.mxu0 0.0
          %1704 = vmatpush1.msra.mxu0 %v1612
          %1705 = vmatprep.subr.mxu0 0.0
          %1706 = vmatpush1.msra.mxu0 %v1613
          %1707 = vmatprep.subr.mxu0 0.0
          %1708 = vmatpush1.msra.mxu0 %v1614
          %1709 = vmatprep.subr.mxu0 0.0
          %1710 = vmatpush1.msra.mxu0 %v1615
          %1711 = vmatprep.subr.mxu0 0.0
          %1712 = vmatpush1.msra.mxu0 %v1616
          %1713 = vmatprep.subr.mxu0 0.0
          %1714 = vmatpush1.msra.mxu0 %v1617
          %1715 = vmatprep.subr.mxu0 0.0
          %1716 = vmatpush1.msra.mxu0 %v1618
          %1717 = vmatprep.subr.mxu0 0.0
          %1718 = vmatpush1.msra.mxu0 %v1619
          %1719 = vmatprep.subr.mxu0 0.0
          %1720 = vmatpush1.msra.mxu0 %v1620
          %1721 = vmatprep.subr.mxu0 0.0
          %1722 = vmatpush1.msra.mxu0 %v1621
          %1723 = vmatprep.subr.mxu0 0.0
          %1724 = vmatpush1.msra.mxu0 %v1622
          %1725 = vmatprep.subr.mxu0 0.0
          %1726 = vmatpush1.msra.mxu0 %v1623
          %1727 = vmatprep.subr.mxu0 0.0
          %1728 = vmatpush1.msra.mxu0 %v1624
          %1729 = vmatprep.subr.mxu0 0.0
          %1730 = vmatpush1.msra.mxu0 %v1625
          %1731 = vmatprep.subr.mxu0 0.0
          %1732 = vmatpush1.msra.mxu0 %v1626
          %1733 = vmatprep.subr.mxu0 0.0
          %1734 = vmatpush1.msra.mxu0 %v1627
          %1735 = vmatprep.subr.mxu0 0.0
          %1736 = vmatpush1.msra.mxu0 %v1628
          %1737 = vmatprep.subr.mxu0 0.0
          %1738 = vmatpush1.msra.mxu0 %v1629
          %1739 = vmatprep.subr.mxu0 0.0
          %1740 = vmatpush1.msra.mxu0 %v1630
          %1741 = vmatprep.subr.mxu0 0.0
          %1742 = vmatpush1.msra.mxu0 %v1631
          %1743 = vmatprep.subr.mxu0 0.0
          %1744 = vmatpush1.msra.mxu0 %v1632
          %1745 = vmatprep.subr.mxu0 0.0
          %1746 = vmatpush1.msra.mxu0 %v1633
          %1747 = vmatprep.subr.mxu0 0.0
          %1748 = vmatpush1.msra.mxu0 %v1634
          %1749 = vmatprep.subr.mxu0 0.0
          %1750 = vmatpush1.msra.mxu0 %v1635
          %1751 = vmatprep.subr.mxu0 0.0
          %1752 = vmatpush1.msra.mxu0 %v1636
          %1753 = vmatprep.subr.mxu0 0.0
          %1754 = vmatpush1.msra.mxu0 %v1637
          %1755 = vmatprep.subr.mxu0 0.0
          %1756 = vmatpush1.msra.mxu0 %v1638
          %1757 = vmatprep.mubr.f32.mxu0 %v1680
          %1758 = vmatmul.mubr.f32.gmra.mrb[0].mxu0 %v1676
          %v1759 = vpop.f32.mrb[0].mxu0
          %v1760 = vadd.f32 %v1671, %v1759
          %v1761 = vpop.f32.mrb[0].mxu0
          %1762 = vdwg.mxu0
          %1763 = vmatprep.subr.mxu0 0.0
          %1764 = vmatpush1.msra.mxu0 %v1639
          %1765 = vmatprep.subr.mxu0 0.0
          %1766 = vmatpush1.msra.mxu0 %v1640
          %1767 = vmatprep.subr.mxu0 0.0
          %1768 = vmatpush1.msra.mxu0 %v1641
          %1769 = vmatprep.subr.mxu0 0.0
          %1770 = vmatpush1.msra.mxu0 %v1642
          %1771 = vmatprep.subr.mxu0 0.0
          %1772 = vmatpush1.msra.mxu0 %v1643
          %1773 = vmatprep.subr.mxu0 0.0
          %1774 = vmatpush1.msra.mxu0 %v1644
          %1775 = vmatprep.subr.mxu0 0.0
          %1776 = vmatpush1.msra.mxu0 %v1645
          %1777 = vmatprep.subr.mxu0 0.0
          %1778 = vmatpush1.msra.mxu0 %v1646
          %1779 = vmatprep.subr.mxu0 0.0
          %1780 = vmatpush1.msra.mxu0 %v1647
          %1781 = vmatprep.subr.mxu0 0.0
          %1782 = vmatpush1.msra.mxu0 %v1648
          %1783 = vmatprep.subr.mxu0 0.0
          %1784 = vmatpush1.msra.mxu0 %v1649
          %1785 = vmatprep.subr.mxu0 0.0
          %1786 = vmatpush1.msra.mxu0 %v1650
          %1787 = vmatprep.subr.mxu0 0.0
          %1788 = vmatpush1.msra.mxu0 %v1651
          %1789 = vmatprep.subr.mxu0 0.0
          %1790 = vmatpush1.msra.mxu0 %v1652
          %1791 = vmatprep.subr.mxu0 0.0
          %1792 = vmatpush1.msra.mxu0 %v1653
          %1793 = vmatprep.subr.mxu0 0.0
          %1794 = vmatpush1.msra.mxu0 %v1654
          %1795 = vmatprep.subr.mxu0 0.0
          %1796 = vmatpush1.msra.mxu0 %v1655
          %1797 = vmatprep.subr.mxu0 0.0
          %1798 = vmatpush1.msra.mxu0 %v1656
          %1799 = vmatprep.subr.mxu0 0.0
          %1800 = vmatpush1.msra.mxu0 %v1657
          %1801 = vmatprep.subr.mxu0 0.0
          %1802 = vmatpush1.msra.mxu0 %v1658
          %1803 = vmatprep.subr.mxu0 0.0
          %1804 = vmatpush1.msra.mxu0 %v1659
          %1805 = vmatprep.subr.mxu0 0.0
          %1806 = vmatpush1.msra.mxu0 %v1660
          %1807 = vmatprep.subr.mxu0 0.0
          %1808 = vmatpush1.msra.mxu0 %v1661
          %1809 = vmatprep.subr.mxu0 0.0
          %1810 = vmatpush1.msra.mxu0 %v1662
          %1811 = vmatprep.subr.mxu0 0.0
          %1812 = vmatpush1.msra.mxu0 %v1663
          %1813 = vmatprep.subr.mxu0 0.0
          %1814 = vmatpush1.msra.mxu0 %v1664
          %1815 = vmatprep.subr.mxu0 0.0
          %1816 = vmatpush1.msra.mxu0 %v1665
          %1817 = vmatprep.subr.mxu0 0.0
          %1818 = vmatpush1.msra.mxu0 %v1666
          %1819 = vmatprep.subr.mxu0 0.0
          %1820 = vmatpush1.msra.mxu0 %v1667
          %1821 = vmatprep.subr.mxu0 0.0
          %1822 = vmatpush1.msra.mxu0 %v1668
          %1823 = vmatprep.subr.mxu0 0.0
          %1824 = vmatpush1.msra.mxu0 %v1669
          %1825 = vmatprep.subr.mxu0 0.0
          %1826 = vmatpush1.msra.mxu0 %v1670
          %1827 = vmatprep.mubr.f32.mxu0 %v1688
          %1828 = vmatmul.mubr.f32.gmra.mrb[0].mxu0 %v1684
          %v1829 = vpop.f32.mrb[0].mxu0
          %v1830 = vadd.f32 %v1760, %v1829
          %v1831 = vpop.f32.mrb[0].mxu0
          %1832 = vdwg.mxu0
          %vm1833 = vcmask 8192
          %1834 = vst.msk [vmem:[#allocation11] sm:$0x1] %vm1833, %v1830
        $region72: #{tpu_custom_call.1} parent=55 // pred_fallthru
          _
        // Predicated region
        $region73: #{tpu_custom_call.1} parent=55 // pred_check
          %p1835 = pneg %p234
        $region74: #{tpu_custom_call.1} parent=55 // pred_check_branch
          %1837 = sbr.rel (%p1835) target = $region76
        $region75: #{tpu_custom_call.1} parent=55 // pred_region
          %s1839 = ssub.s32 16, 16
          %1840 = vsyncadd [#allocation8], %s1839
          %s1842 = sshll.u32 [#allocation11], 4
          %s1843 = int_to_ptr.vmem [resolvable:$true] %s1842
          %1845 = dma.vmem_to_hbm [thread:$0]  %s1843, 16, %s9, [#allocation8]
        $region76: #{tpu_custom_call.1} parent=55 // pred_fallthru
          _
        // Predicated region
        $region77: #{tpu_custom_call.1} parent=55 // pred_check
          %p1846 = pneg %p234
        $region78: #{tpu_custom_call.1} parent=55 // pred_check_branch
          %1848 = sbr.rel (%p1846) target = $region80
        $region79: #{tpu_custom_call.1} parent=55 // pred_region
          %1849 = dma.done [#allocation8], 16
        $region80: #{tpu_custom_call.1} parent=55 // pred_fallthru
          _
      $region56: #{tpu_custom_call.1} parent=5 // pred_fallthru
        _
      %p1850 = scmp.le.s32.totalorder 2, %s22
      // Predicated region
      $region81: #{tpu_custom_call.1} parent=5 // pred_check
        %p1851 = pneg %p1850
      $region82: #{tpu_custom_call.1} parent=5 // pred_check_branch
        %1853 = sbr.rel (%p1851) target = $region84
      $region83: #{tpu_custom_call.1} parent=5 // pred_region
        %s1854 = ssub.s32 %s22, 2
      $region84: #{tpu_custom_call.1} parent=5 // pred_fallthru
        _
    $region6: #{tpu_custom_call.1} parent=1 // loop_footer
      %s26 = sadd.s32 1, %s22
    $region7: #{tpu_custom_call.1} parent=1 // loop_footer_branch
      %21 = sbr.rel target = $region3
    $region8: #{tpu_custom_call.1} parent=1 // loop_exit
      _
    %1855 = vsyncpa [#allocation7], 1
    %s1856 = scalar_lea.sflag [#allocation7], 1
    %1857 = vsyncpa %s1856, 1
    %1858 = vsyncpa [#allocation10], 1
    %1859 = vsyncpa [#allocation8], 1
    %s1860 = scalar_lea.sflag [#allocation8], 1
    %1861 = vsyncpa %s1860, 1

</llo_original>
